<compile_context>
chip_gen: v7x
topology: tpu7x:2x2x1
jax: 0.10.0
libtpu: 0.0.40
codegen_flags: <defaults>
</compile_context>

<pallas_src>
import jax
import jax.numpy as jnp
from jax.experimental import pallas as pl
from jax.experimental.pallas import tpu as pltpu

# ----------------------------- problem sizes -----------------------------
N_NODES = 16          # total nodes per timestep (all graphs in the batch)
B = 2                 # number of graphs
INPUT_DIM = 8
HIDDEN_DIM = 32
LSTM_HIDDEN = 32
OUTPUT_DIM = 4
T_STEPS = 8           # fused rollout length for the demo

FC_PAD = 32                                      # fc output padded to 32 lanes
OUT_SLAB = FC_PAD + 2 * LSTM_HIDDEN + 32         # 128: (probs_pad | h | c | zero pad)


# ------------------------------- the kernel ------------------------------
def policy_kernel(x_ref, a_ref, p_ref,
                  w1_ref, wgin_ref, wlstm_ref, wfc_ref,
                  bias_ref, hc0_ref,
                  out_ref,
                  h_sc, c_sc):
    f32 = jnp.float32
    H = LSTM_HIDDEN
    t = pl.program_id(0)

    # Recurrent state lives in VMEM scratch for the whole fused rollout.
    @pl.when(t == 0)
    def _():
        h_sc[...] = hc0_ref[:, 0:H]
        c_sc[...] = hc0_ref[:, H:2 * H]

    x = x_ref[...]                     # [N, input_dim] for the current timestep
    Ap = a_ref[...]                    # [N, N] = A + I  (GIN self term folded in)

    # Static slices of the packed bias slab (cheap on refs).
    b1 = bias_ref[0:1, 0 * HIDDEN_DIM:1 * HIDDEN_DIM]
    b2 = bias_ref[0:1, 1 * HIDDEN_DIM:2 * HIDDEN_DIM]
    b3 = bias_ref[0:1, 2 * HIDDEN_DIM:3 * HIDDEN_DIM]
    b4 = bias_ref[0:1, 3 * HIDDEN_DIM:4 * HIDDEN_DIM]
    b_lstm = bias_ref[1:2, :]                         # b_ih + b_hh, [1, 4H]
    b_fc = bias_ref[2:3, 0:FC_PAD]                    # [b_fc | -1e30 pad], [1, 32]

    # ---- GINConv 1: MLP((1 + eps) * x + sum_j x_j) with eps = 0  ==  MLP(A' @ x) ----
    h = jnp.dot(jnp.dot(Ap, x, preferred_element_type=f32),
                w1_ref[...], preferred_element_type=f32) + b1
    h = jnp.maximum(h, 0.0)
    h = jnp.dot(h, wgin_ref[0], preferred_element_type=f32) + b2
    x1 = jnp.maximum(h, 0.0)
    # TODO(synk): nn.Dropout(p=0.5) has no deterministic forward semantics; eval-mode identity used.

    # ---- GINConv 2 ----
    h2 = jnp.dot(jnp.dot(Ap, x1, preferred_element_type=f32),
                 wgin_ref[1], preferred_element_type=f32) + b3
    h2 = jnp.maximum(h2, 0.0)
    h2 = jnp.dot(h2, wgin_ref[2], preferred_element_type=f32) + b4
    x2 = jnp.maximum(h2, 0.0)

    # ---- global_mean_pool ----
    pooled = jnp.dot(p_ref[...], x2, preferred_element_type=f32)    # [B, hidden]

    # ---- single-step LSTM; ih/hh weights are sublane-aligned slices of one slab ----
    h_prev = h_sc[...]
    c_prev = c_sc[...]
    w_ih = wlstm_ref[0:HIDDEN_DIM, :]                # [hidden, 4H]
    w_hh = wlstm_ref[HIDDEN_DIM:HIDDEN_DIM + H, :]   # [H, 4H]
    gates = (jnp.dot(pooled, w_ih, preferred_element_type=f32)
             + jnp.dot(h_prev, w_hh, preferred_element_type=f32)
             + b_lstm)                                               # [B, 4H]

    # Whole-vreg EUP ops + lane-index select (PyTorch gate order i, f, g, o).
    lane = jax.lax.broadcasted_iota(jnp.int32, gates.shape, 1)
    is_g = jnp.logical_and(lane >= 2 * H, lane < 3 * H)
    act = jnp.where(is_g, jnp.tanh(gates), jax.nn.sigmoid(gates))
    i_g = act[:, 0 * H:1 * H]
    f_g = act[:, 1 * H:2 * H]
    g_g = act[:, 2 * H:3 * H]
    o_g = act[:, 3 * H:4 * H]
    c_new = f_g * c_prev + i_g * g_g
    h_new = o_g * jnp.tanh(c_new)
    h_sc[...] = h_new
    c_sc[...] = c_new

    # ---- fc + softmax(dim=1) on the lane-padded logits ----
    # Padded lanes carry logit -1e30 -> exp == 0, so softmax over 32 lanes equals
    # softmax over the real OUTPUT_DIM lanes and the padded probs are exactly 0.
    logits = jnp.dot(h_new, wfc_ref[...], preferred_element_type=f32) + b_fc   # [B, 32]
    m = jnp.max(logits, axis=1, keepdims=True)
    e = jnp.exp(logits - m)
    probs_p = e * pl.reciprocal(jnp.sum(e, axis=1, keepdims=True), approx=False)

    # Fused, lane-dense output (all pieces 32-lane aligned) -> single 128-lane store.
    out_ref[...] = jnp.concatenate(
        [probs_p, h_new, c_new, jnp.zeros((B, OUT_SLAB - FC_PAD - 2 * H), f32)], axis=1)


# ---------------------- hoisted preprocessing / packing --------------------
def preprocess_graph(edge_index, batch, num_nodes, num_graphs):
    """Dense A' = A + I and mean-pool matrix P. Graph topology is static across
    RL steps, so this runs once, outside the per-step hot path."""
    A = jnp.zeros((num_nodes, num_nodes), jnp.float32)
    A = A.at[edge_index[1], edge_index[0]].add(1.0)       # message flows source -> target
    Aplus = A + jnp.eye(num_nodes, dtype=jnp.float32)     # (1 + eps) * I + A, eps = 0
    one_hot = jax.nn.one_hot(batch, num_graphs, dtype=jnp.float32)   # [N, B]
    counts = jnp.maximum(jnp.sum(one_hot, axis=0), 1.0)   # guard empty graphs
    P = one_hot.T / counts[:, None]                       # [B, N]
    return Aplus, P


def pack_params(params):
    """Pack 14 tiny parameter tensors into 5 lane-dense slabs (fewer, larger DMAs)."""
    b_fc_pad = jnp.concatenate(
        [params["b_fc"],
         jnp.full((1, FC_PAD - OUTPUT_DIM), -1e30, jnp.float32),
         jnp.zeros((1, 4 * LSTM_HIDDEN - FC_PAD), jnp.float32)], axis=1)
    bias = jnp.concatenate([
        jnp.concatenate([params["b1"], params["b2"], params["b3"], params["b4"]], axis=1),
        params["b_ih"] + params["b_hh"],
        b_fc_pad,
    ], axis=0)                                            # [3, 4H]
    w_fc_pad = jnp.pad(params["w_fc"], ((0, 0), (0, FC_PAD - OUTPUT_DIM)))
    return {
        "w1": params["w1"],                                              # [in, H]
        "w_gin": jnp.stack([params["w2"], params["w3"], params["w4"]], axis=0),  # [3, H, H]
        "w_lstm": jnp.concatenate([params["w_ih"], params["w_hh"]], axis=0),     # [2H, 4H]
        "w_fc": w_fc_pad,                                                # [H, 32]
        "bias": bias,
    }


# ------------------------------- wrappers ----------------------------------
@jax.jit
def gnn_policy_forward_seq(x_seq, Aplus, P, packed, memory):
    """Fused T-step rollout: one pallas_call, recurrent state resident in VMEM.
    Returns (probs [T, B, out], (h_T [1, B, H], c_T [1, B, H]))."""
    T = x_seq.shape[0]
    h0, c0 = memory                                       # [1, B, H] each
    hc0 = jnp.concatenate([h0[0], c0[0]], axis=1)         # [B, 2H]

    out = pl.pallas_call(
        policy_kernel,
        grid=(T,),
        out_shape=jax.ShapeDtypeStruct((T, B, OUT_SLAB), jnp.float32),
        in_specs=[
            pl.BlockSpec((None, N_NODES, INPUT_DIM), lambda t: (t, 0, 0)),   # x_t
            pl.BlockSpec((N_NODES, N_NODES), lambda t: (0, 0)),              # A + I
            pl.BlockSpec((B, N_NODES), lambda t: (0, 0)),                    # P
            pl.BlockSpec((INPUT_DIM, HIDDEN_DIM), lambda t: (0, 0)),         # w1
            pl.BlockSpec((3, HIDDEN_DIM, HIDDEN_DIM), lambda t: (0, 0, 0)),  # w2|w3|w4
            pl.BlockSpec((2 * LSTM_HIDDEN, 4 * LSTM_HIDDEN), lambda t: (0, 0)),  # [w_ih; w_hh]
            pl.BlockSpec((LSTM_HIDDEN, FC_PAD), lambda t: (0, 0)),           # w_fc (padded)
            pl.BlockSpec((3, 4 * LSTM_HIDDEN), lambda t: (0, 0)),            # bias slab
            pl.BlockSpec((B, 2 * LSTM_HIDDEN), lambda t: (0, 0)),            # h0 | c0
        ],
        out_specs=pl.BlockSpec((None, B, OUT_SLAB), lambda t: (t, 0, 0)),
        scratch_shapes=[pltpu.VMEM((B, LSTM_HIDDEN), jnp.float32),
                        pltpu.VMEM((B, LSTM_HIDDEN), jnp.float32)],
        compiler_params=pltpu.CompilerParams(dimension_semantics=("arbitrary",)),
    )(x_seq, Aplus, P, packed["w1"], packed["w_gin"], packed["w_lstm"],
      packed["w_fc"], packed["bias"], hc0)

    probs = out[:, :, 0:OUTPUT_DIM]
    h_seq = out[:, :, FC_PAD:FC_PAD + LSTM_HIDDEN]
    c_seq = out[:, :, FC_PAD + LSTM_HIDDEN:FC_PAD + 2 * LSTM_HIDDEN]
    return probs, (h_seq[-1][None, :, :], c_seq[-1][None, :, :])


def gnn_policy_forward(x, edge_index, batch, params, memory):
    """Single-step forward matching the PyTorch module interface."""
    Aplus, P = preprocess_graph(edge_index, batch, x.shape[0], B)
    packed = pack_params(params)
    probs, mem = gnn_policy_forward_seq(x[None], Aplus, P, packed, memory)
    return probs[0], mem


# --------------------------- parameter creation ----------------------------
def init_params(key):
    ks = jax.random.split(key, 14)
    s = 0.1

    def mat(k, shape):
        return jax.random.normal(k, shape, jnp.float32) * s

    return {
        # GIN 1 MLP: Linear(input, hidden) -> ReLU -> Linear(hidden, hidden)
        "w1": mat(ks[0], (INPUT_DIM, HIDDEN_DIM)),
        "b1": mat(ks[1], (1, HIDDEN_DIM)),
        "w2": mat(ks[2], (HIDDEN_DIM, HIDDEN_DIM)),
        "b2": mat(ks[3], (1, HIDDEN_DIM)),
        # GIN 2 MLP
        "w3": mat(ks[4], (HIDDEN_DIM, HIDDEN_DIM)),
        "b3": mat(ks[5], (1, HIDDEN_DIM)),
        "w4": mat(ks[6], (HIDDEN_DIM, HIDDEN_DIM)),
        "b4": mat(ks[7], (1, HIDDEN_DIM)),
        # LSTM (gate order i, f, g, o), stored transposed: [in, 4*H]
        "w_ih": mat(ks[8], (HIDDEN_DIM, 4 * LSTM_HIDDEN)),
        "b_ih": mat(ks[9], (1, 4 * LSTM_HIDDEN)),
        "w_hh": mat(ks[10], (LSTM_HIDDEN, 4 * LSTM_HIDDEN)),
        "b_hh": mat(ks[11], (1, 4 * LSTM_HIDDEN)),
        # fc
        "w_fc": mat(ks[12], (LSTM_HIDDEN, OUTPUT_DIM)),
        "b_fc": mat(ks[13], (1, OUTPUT_DIM)),
    }


# ----------------------- pure-JAX reference (sanity) ------------------------
def reference_forward(x, edge_index, batch, params, memory):
    """Direct transcription of the PyTorch module forward (single step)."""
    n = x.shape[0]
    A = jnp.zeros((n, n), jnp.float32).at[edge_index[1], edge_index[0]].add(1.0)
    one_hot = jax.nn.one_hot(batch, B, dtype=jnp.float32)
    P = one_hot.T / jnp.maximum(jnp.sum(one_hot, axis=0), 1.0)[:, None]

    def gin(xin, w_a, b_a, w_b, b_b):
        h = (xin + A @ xin) @ w_a + b_a
        h = jnp.maximum(h, 0.0)
        h = h @ w_b + b_b
        return jnp.maximum(h, 0.0)

    x1 = gin(x, params["w1"], params["b1"], params["w2"], params["b2"])
    x2 = gin(x1, params["w3"], params["b3"], params["w4"], params["b4"])
    pooled = P @ x2
    h0, c0 = memory
    gates = pooled @ params["w_ih"] + params["b_ih"] + h0[0] @ params["w_hh"] + params["b_hh"]
    H = LSTM_HIDDEN
    i_g = jax.nn.sigmoid(gates[:, :H])
    f_g = jax.nn.sigmoid(gates[:, H:2 * H])
    g_g = jnp.tanh(gates[:, 2 * H:3 * H])
    o_g = jax.nn.sigmoid(gates[:, 3 * H:])
    c1 = f_g * c0[0] + i_g * g_g
    h1 = o_g * jnp.tanh(c1)
    logits = h1 @ params["w_fc"] + params["b_fc"]
    return jax.nn.softmax(logits, axis=1), (h1[None], c1[None])


def reference_rollout(x_seq, edge_index, batch, params, memory):
    probs_list = []
    mem = memory
    for t in range(x_seq.shape[0]):
        p, mem = reference_forward(x_seq[t], edge_index, batch, params, mem)
        probs_list.append(p)
    return jnp.stack(probs_list, axis=0), mem


# --------------------------------- main -------------------------------------
if __name__ == "__main__":
    key = jax.random.PRNGKey(0)
    k_x, k_h, k_c, k_p = jax.random.split(key, 4)

    # Two graphs of 8 nodes each, ring topology (directed both ways).
    nodes_per_graph = N_NODES // B
    src_list, dst_list = [], []
    for g in range(B):
        base = g * nodes_per_graph
        for i in range(nodes_per_graph):
            j = (i + 1) % nodes_per_graph
            src_list += [base + i, base + j]
            dst_list += [base + j, base + i]
    edge_index = jnp.array([src_list, dst_list], dtype=jnp.int32)   # [2, E]
    batch = jnp.repeat(jnp.arange(B, dtype=jnp.int32), nodes_per_graph)

    x_seq = jax.random.normal(k_x, (T_STEPS, N_NODES, INPUT_DIM), jnp.float32)
    h0 = jax.random.normal(k_h, (1, B, LSTM_HIDDEN), jnp.float32) * 0.1
    c0 = jax.random.normal(k_c, (1, B, LSTM_HIDDEN), jnp.float32) * 0.1
    params = init_params(k_p)

    # Hoisted (once per topology / parameter set, not per step).
    Aplus, P = preprocess_graph(edge_index, batch, N_NODES, B)
    packed = pack_params(params)

    # --- fused T-step rollout in ONE pallas_call ---
    probs_seq, (h_T, c_T) = gnn_policy_forward_seq(x_seq, Aplus, P, packed, (h0, c0))
    jax.block_until_ready((probs_seq, h_T, c_T))

    ref_probs_seq, (ref_h_T, ref_c_T) = reference_rollout(x_seq, edge_index, batch,
                                                          params, (h0, c0))
    assert probs_seq.shape == (T_STEPS, B, OUTPUT_DIM)
    assert h_T.shape == (1, B, LSTM_HIDDEN) and c_T.shape == (1, B, LSTM_HIDDEN)
    assert jnp.allclose(probs_seq, ref_probs_seq, atol=1e-4, rtol=1e-4)
    assert jnp.allclose(h_T, ref_h_T, atol=1e-4, rtol=1e-4)
    assert jnp.allclose(c_T, ref_c_T, atol=1e-4, rtol=1e-4)
    assert jnp.allclose(jnp.sum(probs_seq, axis=-1), jnp.ones((T_STEPS, B)), atol=1e-5)

    # --- single-step call matching the module's forward interface ---
    probs1, (h1, c1) = gnn_policy_forward(x_seq[0], edge_index, batch, params, (h0, c0))
    jax.block_until_ready((probs1, h1, c1))
    ref_probs1, (ref_h1, ref_c1) = reference_forward(x_seq[0], edge_index, batch,
                                                     params, (h0, c0))
    assert probs1.shape == (B, OUTPUT_DIM)
    assert jnp.allclose(probs1, ref_probs1, atol=1e-5, rtol=1e-5)
    assert jnp.allclose(h1, ref_h1, atol=1e-5, rtol=1e-5)
    assert jnp.allclose(c1, ref_c1, atol=1e-5, rtol=1e-5)

    print("KERNEL_OK")
</pallas_src>

<mosaic_0001>
module attributes {stable_mosaic.version = 11 : i64} {
  func.func @policy_kernel(%arg0: i32, %arg1: memref<1x16x8xf32, #tpu.memory_space<vmem>>, %arg2: memref<16x16xf32, #tpu.memory_space<vmem>>, %arg3: memref<2x16xf32, #tpu.memory_space<vmem>>, %arg4: memref<8x32xf32, #tpu.memory_space<vmem>>, %arg5: memref<3x32x32xf32, #tpu.memory_space<vmem>>, %arg6: memref<64x128xf32, #tpu.memory_space<vmem>>, %arg7: memref<32x32xf32, #tpu.memory_space<vmem>>, %arg8: memref<3x128xf32, #tpu.memory_space<vmem>>, %arg9: memref<2x64xf32, #tpu.memory_space<vmem>>, %arg10: memref<1x2x128xf32, #tpu.memory_space<vmem>>, %arg11: memref<2x32xf32, #tpu.memory_space<vmem>>, %arg12: memref<2x32xf32, #tpu.memory_space<vmem>>) attributes {dimension_semantics = [#tpu.dimension_semantics<arbitrary>], iteration_bounds = array<i64: 8>, scalar_prefetch = 0 : i64, scratch_operands = 2 : i64, tpu.core_type = #tpu.core_type<tc>, window_params = [{transform_indices = @transform_0, window_bounds = array<i64: 1, 16, 8>}, {pipeline_mode = #tpu.pipeline_mode<synchronous>, transform_indices = @transform_1, window_bounds = array<i64: 16, 16>}, {pipeline_mode = #tpu.pipeline_mode<synchronous>, transform_indices = @transform_2, window_bounds = array<i64: 2, 16>}, {pipeline_mode = #tpu.pipeline_mode<synchronous>, transform_indices = @transform_3, window_bounds = array<i64: 8, 32>}, {pipeline_mode = #tpu.pipeline_mode<synchronous>, transform_indices = @transform_4, window_bounds = array<i64: 3, 32, 32>}, {pipeline_mode = #tpu.pipeline_mode<synchronous>, transform_indices = @transform_5, window_bounds = array<i64: 64, 128>}, {pipeline_mode = #tpu.pipeline_mode<synchronous>, transform_indices = @transform_6, window_bounds = array<i64: 32, 32>}, {pipeline_mode = #tpu.pipeline_mode<synchronous>, transform_indices = @transform_7, window_bounds = array<i64: 3, 128>}, {pipeline_mode = #tpu.pipeline_mode<synchronous>, transform_indices = @transform_8, window_bounds = array<i64: 2, 64>}, {transform_indices = @transform_9, window_bounds = array<i64: 1, 2, 128>}]} {
    %c0_i32 = arith.constant 0 : i32
    %0 = arith.cmpi eq, %arg0, %c0_i32 : i32
    %1 = arith.extui %0 : i1 to i32
    %c0_i32_0 = arith.constant 0 : i32
    %2 = arith.cmpi ne, %1, %c0_i32_0 : i32
    scf.if %2 {
      %c0_59 = arith.constant 0 : index
      %c0_60 = arith.constant 0 : index
      %95 = vector.load %arg9[%c0_59, %c0_60] : memref<2x64xf32, #tpu.memory_space<vmem>>, vector<2x32xf32>
      %c0_61 = arith.constant 0 : index
      %c0_62 = arith.constant 0 : index
      %96 = vector.load %arg11[%c0_61, %c0_62] : memref<2x32xf32, #tpu.memory_space<vmem>>, vector<2x32xf32>
      tpu.vector_store %arg11[%c0_61, %c0_62], %95 {strides = array<i32>} : memref<2x32xf32, #tpu.memory_space<vmem>>, vector<2x32xf32>,
      %c0_63 = arith.constant 0 : index
      %c32_64 = arith.constant 32 : index
      %97 = vector.load %arg9[%c0_63, %c32_64] : memref<2x64xf32, #tpu.memory_space<vmem>>, vector<2x32xf32>
      %c0_65 = arith.constant 0 : index
      %c0_66 = arith.constant 0 : index
      %98 = vector.load %arg12[%c0_65, %c0_66] : memref<2x32xf32, #tpu.memory_space<vmem>>, vector<2x32xf32>
      tpu.vector_store %arg12[%c0_65, %c0_66], %97 {strides = array<i32>} : memref<2x32xf32, #tpu.memory_space<vmem>>, vector<2x32xf32>,
    } else {
    }
    %c0 = arith.constant 0 : index
    %c0_1 = arith.constant 0 : index
    %c0_2 = arith.constant 0 : index
    %3 = vector.load %arg1[%c0, %c0_1, %c0_2] : memref<1x16x8xf32, #tpu.memory_space<vmem>>, vector<1x16x8xf32>
    %4 = vector.shape_cast %3 : vector<1x16x8xf32> to vector<16x8xf32>
    %c0_3 = arith.constant 0 : index
    %c0_4 = arith.constant 0 : index
    %5 = vector.load %arg2[%c0_3, %c0_4] : memref<16x16xf32, #tpu.memory_space<vmem>>, vector<16x16xf32>
    %c0_5 = arith.constant 0 : index
    %c0_6 = arith.constant 0 : index
    %6 = vector.load %arg8[%c0_5, %c0_6] : memref<3x128xf32, #tpu.memory_space<vmem>>, vector<1x32xf32>
    %c0_7 = arith.constant 0 : index
    %c32 = arith.constant 32 : index
    %7 = vector.load %arg8[%c0_7, %c32] : memref<3x128xf32, #tpu.memory_space<vmem>>, vector<1x32xf32>
    %c0_8 = arith.constant 0 : index
    %c64 = arith.constant 64 : index
    %8 = vector.load %arg8[%c0_8, %c64] : memref<3x128xf32, #tpu.memory_space<vmem>>, vector<1x32xf32>
    %c0_9 = arith.constant 0 : index
    %c96 = arith.constant 96 : index
    %9 = vector.load %arg8[%c0_9, %c96] : memref<3x128xf32, #tpu.memory_space<vmem>>, vector<1x32xf32>
    %c1 = arith.constant 1 : index
    %c0_10 = arith.constant 0 : index
    %10 = vector.load %arg8[%c1, %c0_10] : memref<3x128xf32, #tpu.memory_space<vmem>>, vector<1x128xf32>
    %c2 = arith.constant 2 : index
    %c0_11 = arith.constant 0 : index
    %11 = vector.load %arg8[%c2, %c0_11] : memref<3x128xf32, #tpu.memory_space<vmem>>, vector<1x32xf32>
    %cst = arith.constant dense<0.000000e+00> : vector<16x8xf32>
    %12 = tpu.matmul %5, %4, %cst {dimension_numbers = #tpu.dot_dimension_numbers<[1], [0], [0], [1], [0, 0, 1, 1], [], []>} : vector<16x16xf32>, vector<16x8xf32>, vector<16x8xf32> -> vector<16x8xf32>
    %c0_12 = arith.constant 0 : index
    %c0_13 = arith.constant 0 : index
    %13 = vector.load %arg4[%c0_12, %c0_13] : memref<8x32xf32, #tpu.memory_space<vmem>>, vector<8x32xf32>
    %cst_14 = arith.constant dense<0.000000e+00> : vector<16x32xf32>
    %14 = tpu.matmul %12, %13, %cst_14 {dimension_numbers = #tpu.dot_dimension_numbers<[1], [0], [0], [1], [0, 0, 1, 1], [], []>} : vector<16x8xf32>, vector<8x32xf32>, vector<16x32xf32> -> vector<16x32xf32>
    %15 = vector.broadcast %6 : vector<1x32xf32> to vector<16x32xf32>
    %16 = arith.addf %14, %15 : vector<16x32xf32>
    %cst_15 = arith.constant 0.000000e+00 : f32
    %17 = vector.broadcast %cst_15 : f32 to vector<16x32xf32>
    %18 = arith.maximumf %16, %17 : vector<16x32xf32>
    %c0_16 = arith.constant 0 : index
    %c0_17 = arith.constant 0 : index
    %c0_18 = arith.constant 0 : index
    %19 = vector.load %arg5[%c0_16, %c0_17, %c0_18] : memref<3x32x32xf32, #tpu.memory_space<vmem>>, vector<1x32x32xf32>
    %20 = vector.shape_cast %19 : vector<1x32x32xf32> to vector<32x32xf32>
    %cst_19 = arith.constant dense<0.000000e+00> : vector<16x32xf32>
    %21 = tpu.matmul %18, %20, %cst_19 {dimension_numbers = #tpu.dot_dimension_numbers<[1], [0], [0], [1], [0, 0, 1, 1], [], []>} : vector<16x32xf32>, vector<32x32xf32>, vector<16x32xf32> -> vector<16x32xf32>
    %22 = vector.broadcast %7 : vector<1x32xf32> to vector<16x32xf32>
    %23 = arith.addf %21, %22 : vector<16x32xf32>
    %cst_20 = arith.constant 0.000000e+00 : f32
    %24 = vector.broadcast %cst_20 : f32 to vector<16x32xf32>
    %25 = arith.maximumf %23, %24 : vector<16x32xf32>
    %cst_21 = arith.constant dense<0.000000e+00> : vector<16x32xf32>
    %26 = tpu.matmul %5, %25, %cst_21 {dimension_numbers = #tpu.dot_dimension_numbers<[1], [0], [0], [1], [0, 0, 1, 1], [], []>} : vector<16x16xf32>, vector<16x32xf32>, vector<16x32xf32> -> vector<16x32xf32>
    %c1_22 = arith.constant 1 : index
    %c0_23 = arith.constant 0 : index
    %c0_24 = arith.constant 0 : index
    %27 = vector.load %arg5[%c1_22, %c0_23, %c0_24] : memref<3x32x32xf32, #tpu.memory_space<vmem>>, vector<1x32x32xf32>
    %28 = vector.shape_cast %27 : vector<1x32x32xf32> to vector<32x32xf32>
    %cst_25 = arith.constant dense<0.000000e+00> : vector<16x32xf32>
    %29 = tpu.matmul %26, %28, %cst_25 {dimension_numbers = #tpu.dot_dimension_numbers<[1], [0], [0], [1], [0, 0, 1, 1], [], []>} : vector<16x32xf32>, vector<32x32xf32>, vector<16x32xf32> -> vector<16x32xf32>
    %30 = vector.broadcast %8 : vector<1x32xf32> to vector<16x32xf32>
    %31 = arith.addf %29, %30 : vector<16x32xf32>
    %cst_26 = arith.constant 0.000000e+00 : f32
    %32 = vector.broadcast %cst_26 : f32 to vector<16x32xf32>
    %33 = arith.maximumf %31, %32 : vector<16x32xf32>
    %c2_27 = arith.constant 2 : index
    %c0_28 = arith.constant 0 : index
    %c0_29 = arith.constant 0 : index
    %34 = vector.load %arg5[%c2_27, %c0_28, %c0_29] : memref<3x32x32xf32, #tpu.memory_space<vmem>>, vector<1x32x32xf32>
    %35 = vector.shape_cast %34 : vector<1x32x32xf32> to vector<32x32xf32>
    %cst_30 = arith.constant dense<0.000000e+00> : vector<16x32xf32>
    %36 = tpu.matmul %33, %35, %cst_30 {dimension_numbers = #tpu.dot_dimension_numbers<[1], [0], [0], [1], [0, 0, 1, 1], [], []>} : vector<16x32xf32>, vector<32x32xf32>, vector<16x32xf32> -> vector<16x32xf32>
    %37 = vector.broadcast %9 : vector<1x32xf32> to vector<16x32xf32>
    %38 = arith.addf %36, %37 : vector<16x32xf32>
    %cst_31 = arith.constant 0.000000e+00 : f32
    %39 = vector.broadcast %cst_31 : f32 to vector<16x32xf32>
    %40 = arith.maximumf %38, %39 : vector<16x32xf32>
    %c0_32 = arith.constant 0 : index
    %c0_33 = arith.constant 0 : index
    %41 = vector.load %arg3[%c0_32, %c0_33] : memref<2x16xf32, #tpu.memory_space<vmem>>, vector<2x16xf32>
    %cst_34 = arith.constant dense<0.000000e+00> : vector<2x32xf32>
    %42 = tpu.matmul %41, %40, %cst_34 {dimension_numbers = #tpu.dot_dimension_numbers<[1], [0], [0], [1], [0, 0, 1, 1], [], []>} : vector<2x16xf32>, vector<16x32xf32>, vector<2x32xf32> -> vector<2x32xf32>
    %c0_35 = arith.constant 0 : index
    %c0_36 = arith.constant 0 : index
    %43 = vector.load %arg11[%c0_35, %c0_36] : memref<2x32xf32, #tpu.memory_space<vmem>>, vector<2x32xf32>
    %c0_37 = arith.constant 0 : index
    %c0_38 = arith.constant 0 : index
    %44 = vector.load %arg12[%c0_37, %c0_38] : memref<2x32xf32, #tpu.memory_space<vmem>>, vector<2x32xf32>
    %c0_39 = arith.constant 0 : index
    %c0_40 = arith.constant 0 : index
    %45 = vector.load %arg6[%c0_39, %c0_40] : memref<64x128xf32, #tpu.memory_space<vmem>>, vector<32x128xf32>
    %c32_41 = arith.constant 32 : index
    %c0_42 = arith.constant 0 : index
    %46 = vector.load %arg6[%c32_41, %c0_42] : memref<64x128xf32, #tpu.memory_space<vmem>>, vector<32x128xf32>
    %cst_43 = arith.constant dense<0.000000e+00> : vector<2x128xf32>
    %47 = tpu.matmul %42, %45, %cst_43 {dimension_numbers = #tpu.dot_dimension_numbers<[1], [0], [0], [1], [0, 0, 1, 1], [], []>} : vector<2x32xf32>, vector<32x128xf32>, vector<2x128xf32> -> vector<2x128xf32>
    %cst_44 = arith.constant dense<0.000000e+00> : vector<2x128xf32>
    %48 = tpu.matmul %43, %46, %cst_44 {dimension_numbers = #tpu.dot_dimension_numbers<[1], [0], [0], [1], [0, 0, 1, 1], [], []>} : vector<2x32xf32>, vector<32x128xf32>, vector<2x128xf32> -> vector<2x128xf32>
    %49 = arith.addf %47, %48 : vector<2x128xf32>
    %50 = vector.broadcast %10 : vector<1x128xf32> to vector<2x128xf32>
    %51 = arith.addf %49, %50 : vector<2x128xf32>
    %52 = tpu.iota {dimensions = array<i32: 1>} : vector<2x128xi32>
    %c64_i32 = arith.constant 64 : i32
    %53 = vector.broadcast %c64_i32 : i32 to vector<2x128xi32>
    %54 = arith.cmpi sge, %52, %53 : vector<2x128xi32>
    %c96_i32 = arith.constant 96 : i32
    %55 = vector.broadcast %c96_i32 : i32 to vector<2x128xi32>
    %56 = arith.cmpi slt, %52, %55 : vector<2x128xi32>
    %57 = arith.andi %54, %56 : vector<2x128xi1>
    %58 = math.tanh %51 : vector<2x128xf32>
    %59 = arith.negf %51 : vector<2x128xf32>
    %60 = math.exp %59 : vector<2x128xf32>
    %cst_45 = arith.constant 1.000000e+00 : f32
    %61 = vector.broadcast %cst_45 : f32 to vector<2x128xf32>
    %62 = arith.addf %61, %60 : vector<2x128xf32>
    %63 = arith.divf %61, %62 : vector<2x128xf32>
    %64 = arith.select %57, %58, %63 : vector<2x128xi1>, vector<2x128xf32>
    %65 = vector.extract_strided_slice %64 {offsets = [0, 0], sizes = [2, 32], strides = [1, 1]} : vector<2x128xf32> to vector<2x32xf32>
    %66 = vector.extract_strided_slice %64 {offsets = [0, 32], sizes = [2, 32], strides = [1, 1]} : vector<2x128xf32> to vector<2x32xf32>
    %67 = vector.extract_strided_slice %64 {offsets = [0, 64], sizes = [2, 32], strides = [1, 1]} : vector<2x128xf32> to vector<2x32xf32>
    %68 = vector.extract_strided_slice %64 {offsets = [0, 96], sizes = [2, 32], strides = [1, 1]} : vector<2x128xf32> to vector<2x32xf32>
    %69 = arith.mulf %66, %44 : vector<2x32xf32>
    %70 = arith.mulf %65, %67 : vector<2x32xf32>
    %71 = arith.addf %69, %70 : vector<2x32xf32>
    %72 = math.tanh %71 : vector<2x32xf32>
    %73 = arith.mulf %68, %72 : vector<2x32xf32>
    %c0_46 = arith.constant 0 : index
    %c0_47 = arith.constant 0 : index
    %74 = vector.load %arg11[%c0_46, %c0_47] : memref<2x32xf32, #tpu.memory_space<vmem>>, vector<2x32xf32>
    tpu.vector_store %arg11[%c0_46, %c0_47], %73 {strides = array<i32>} : memref<2x32xf32, #tpu.memory_space<vmem>>, vector<2x32xf32>,
    %c0_48 = arith.constant 0 : index
    %c0_49 = arith.constant 0 : index
    %75 = vector.load %arg12[%c0_48, %c0_49] : memref<2x32xf32, #tpu.memory_space<vmem>>, vector<2x32xf32>
    tpu.vector_store %arg12[%c0_48, %c0_49], %71 {strides = array<i32>} : memref<2x32xf32, #tpu.memory_space<vmem>>, vector<2x32xf32>,
    %c0_50 = arith.constant 0 : index
    %c0_51 = arith.constant 0 : index
    %76 = vector.load %arg7[%c0_50, %c0_51] : memref<32x32xf32, #tpu.memory_space<vmem>>, vector<32x32xf32>
    %cst_52 = arith.constant dense<0.000000e+00> : vector<2x32xf32>
    %77 = tpu.matmul %73, %76, %cst_52 {dimension_numbers = #tpu.dot_dimension_numbers<[1], [0], [0], [1], [0, 0, 1, 1], [], []>} : vector<2x32xf32>, vector<32x32xf32>, vector<2x32xf32> -> vector<2x32xf32>
    %78 = vector.broadcast %11 : vector<1x32xf32> to vector<2x32xf32>
    %79 = arith.addf %77, %78 : vector<2x32xf32>
    %cst_53 = arith.constant dense<0xFF800000> : vector<2xf32>
    %80 = vector.multi_reduction <maximumf>, %79, %cst_53 [1] : vector<2x32xf32> to vector<2xf32>
    %81 = vector.shape_cast %80 : vector<2xf32> to vector<2x1xf32>
    %82 = vector.broadcast %81 : vector<2x1xf32> to vector<2x32xf32>
    %83 = arith.subf %79, %82 : vector<2x32xf32>
    %84 = math.exp %83 : vector<2x32xf32>
    %cst_54 = arith.constant dense<0.000000e+00> : vector<2xf32>
    %85 = vector.multi_reduction <add>, %84, %cst_54 [1] : vector<2x32xf32> to vector<2xf32>
    %86 = vector.shape_cast %85 : vector<2xf32> to vector<2x1xf32>
    %87 = tpu.reciprocal %86 : vector<2x1xf32> -> vector<2x1xf32>
    %88 = vector.broadcast %87 : vector<2x1xf32> to vector<2x32xf32>
    %89 = arith.mulf %84, %88 : vector<2x32xf32>
    %cst_55 = arith.constant 0.000000e+00 : f32
    %90 = vector.broadcast %cst_55 : f32 to vector<2x32xf32>
    %91 = tpu.concatenate %89, %73, %71, %90 in 1 : vector<2x32xf32>, vector<2x32xf32>, vector<2x32xf32>, vector<2x32xf32> -> vector<2x128xf32>
    %c0_56 = arith.constant 0 : index
    %c0_57 = arith.constant 0 : index
    %c0_58 = arith.constant 0 : index
    %92 = vector.load %arg10[%c0_56, %c0_57, %c0_58] : memref<1x2x128xf32, #tpu.memory_space<vmem>>, vector<1x2x128xf32>
    %93 = vector.shape_cast %92 : vector<1x2x128xf32> to vector<2x128xf32>
    %94 = vector.shape_cast %91 : vector<2x128xf32> to vector<1x2x128xf32>
    tpu.vector_store %arg10[%c0_56, %c0_57, %c0_58], %94 {strides = array<i32>} : memref<1x2x128xf32, #tpu.memory_space<vmem>>, vector<1x2x128xf32>,
    return
  }
  func.func @transform_0(%arg0: i32) -> (i32, i32, i32) {
    %c0_i32 = arith.constant 0 : i32
    %c0_i32_0 = arith.constant 0 : i32
    %c0_i32_1 = arith.constant 0 : i32
    return %arg0, %c0_i32, %c0_i32_0 : i32, i32, i32
  }
  func.func @transform_1(%arg0: i32) -> (i32, i32) {
    %c0_i32 = arith.constant 0 : i32
    %c0_i32_0 = arith.constant 0 : i32
    %c0_i32_1 = arith.constant 0 : i32
    return %c0_i32, %c0_i32_0 : i32, i32
  }
  func.func @transform_2(%arg0: i32) -> (i32, i32) {
    %c0_i32 = arith.constant 0 : i32
    %c0_i32_0 = arith.constant 0 : i32
    %c0_i32_1 = arith.constant 0 : i32
    return %c0_i32, %c0_i32_0 : i32, i32
  }
  func.func @transform_3(%arg0: i32) -> (i32, i32) {
    %c0_i32 = arith.constant 0 : i32
    %c0_i32_0 = arith.constant 0 : i32
    %c0_i32_1 = arith.constant 0 : i32
    return %c0_i32, %c0_i32_0 : i32, i32
  }
  func.func @transform_4(%arg0: i32) -> (i32, i32, i32) {
    %c0_i32 = arith.constant 0 : i32
    %c0_i32_0 = arith.constant 0 : i32
    %c0_i32_1 = arith.constant 0 : i32
    %c0_i32_2 = arith.constant 0 : i32
    return %c0_i32, %c0_i32_0, %c0_i32_1 : i32, i32, i32
  }
  func.func @transform_5(%arg0: i32) -> (i32, i32) {
    %c0_i32 = arith.constant 0 : i32
    %c0_i32_0 = arith.constant 0 : i32
    %c0_i32_1 = arith.constant 0 : i32
    return %c0_i32, %c0_i32_0 : i32, i32
  }
  func.func @transform_6(%arg0: i32) -> (i32, i32) {
    %c0_i32 = arith.constant 0 : i32
    %c0_i32_0 = arith.constant 0 : i32
    %c0_i32_1 = arith.constant 0 : i32
    return %c0_i32, %c0_i32_0 : i32, i32
  }
  func.func @transform_7(%arg0: i32) -> (i32, i32) {
    %c0_i32 = arith.constant 0 : i32
    %c0_i32_0 = arith.constant 0 : i32
    %c0_i32_1 = arith.constant 0 : i32
    return %c0_i32, %c0_i32_0 : i32, i32
  }
  func.func @transform_8(%arg0: i32) -> (i32, i32) {
    %c0_i32 = arith.constant 0 : i32
    %c0_i32_0 = arith.constant 0 : i32
    %c0_i32_1 = arith.constant 0 : i32
    return %c0_i32, %c0_i32_0 : i32, i32
  }
  func.func @transform_9(%arg0: i32) -> (i32, i32, i32) {
    %c0_i32 = arith.constant 0 : i32
    %c0_i32_0 = arith.constant 0 : i32
    %c0_i32_1 = arith.constant 0 : i32
    return %arg0, %c0_i32, %c0_i32_0 : i32, i32, i32
  }
}

</mosaic_0001>

<llo_original>
// kernel: gnn_policy_forward_seq.1
$region0: #{gnn_policy_forward_seq.1}
  #allocation0 [shape = 'u32[]', space=smem, size = 0x4, offset = 0x4, fixed_abs, tag = 'smem constant byte address 0x4 - core index']
  #allocation1 [shape = 'u32[144,128]{1,0:T(1,128)}', space=vmem, size = 0x12000, scoped, tag = 'internal scratch']
  #allocation2 [shape = 'f32[2,32]{1,0:T(2,128)}', space=vmem, size = 0x400, scoped, tag = 'scratch operand']
  #allocation3 [shape = 'f32[2,32]{1,0:T(2,128)}', space=vmem, size = 0x400, scoped, tag = 'scratch operand']
  %s0 = inlined_call_operand.vmem [shape: f32[8,16,8], index: 0, kind: input, shape index: {}]
  %s1 = inlined_call_operand.vmem [shape: f32[16,16], index: 1, kind: input, shape index: {}]
  %s2 = inlined_call_operand.hbm [shape: f32[2,16], index: 2, kind: input, shape index: {}]
  %s3 = inlined_call_operand.vmem [shape: f32[8,32], index: 3, kind: input, shape index: {}]
  %s4 = inlined_call_operand.vmem [shape: f32[3,32,32], index: 4, kind: input, shape index: {}]
  %s5 = inlined_call_operand.vmem [shape: f32[64,128], index: 5, kind: input, shape index: {}]
  %s6 = inlined_call_operand.vmem [shape: f32[32,32], index: 6, kind: input, shape index: {}]
  %s7 = inlined_call_operand.hbm [shape: f32[3,128], index: 7, kind: input, shape index: {}]
  %s8 = inlined_call_operand.vmem [shape: f32[2,64], index: 8, kind: input, shape index: {}]
  %s9 = inlined_call_operand.vmem [shape: f32[8,2,128], index: 9, kind: output, shape index: {}]
  %s10 = sld [smem:[#allocation0]]
  $region81: #{gnn_policy_forward_seq.1} parent=0
    _
  %s12 = ssub.s32 1, %s10
  %s13 = scalar_select 0, %s12, %s10
  $region1: #{gnn_policy_forward_seq.1} parent=0
    #allocation4 [shape = 'u8[1024]{0}', space=vmem, size = 0x400, scoped, tag = 'input window, operand 2, single buffered']
    #allocation5 [shape = 's32[2]{0}', space=sflag, size = 0x8, scoped, tag = 'scoped memory for gnn_policy_forward_seq.1']
    #allocation6 [shape = 'u8[2048]{0}', space=vmem, size = 0x800, scoped, tag = 'input window, operand 7, single buffered']
    #allocation7 [shape = 's32[1]{0}', space=sflag, size = 0x4, scoped, tag = 'scoped memory for gnn_policy_forward_seq.1']
    %14 = vsyncpa [#allocation5], 0
    %15 = vsyncpa [#allocation7], 0
    loop: start=0, step=1, limit=10
    $region2: #{gnn_policy_forward_seq.1} parent=1 // loop_pre_header
      _
    $region3: #{gnn_policy_forward_seq.1} parent=1 // loop_header
      %s17 = sphi 0, %s21
      %p18 = scmp.ge.s32.totalorder %s17, 10
      %s27 = sphi 0, %s29
      %s30 = sphi 0, %s27
      %s31 = sphi 0, %s30
      %s47 = sphi 0, %s31
      %s51 = sphi 0, %s51
      %s53 = sphi 0, %s51
      %s54 = sphi 0, %s53
      %s68 = sphi 0, %s54
      %s72 = sphi 0, %s72
      %s74 = sphi 0, %s72
      %s75 = sphi 0, %s74
      %s89 = sphi 0, %s75
      %s93 = sphi 0, %s93
      %s95 = sphi 0, %s93
      %s96 = sphi 0, %s95
      %s110 = sphi 0, %s96
      %s114 = sphi 0, %s114
      %s116 = sphi 0, %s114
      %s117 = sphi 0, %s116
      %s131 = sphi 0, %s117
      %s135 = sphi 0, %s135
      %s137 = sphi 0, %s135
      %s138 = sphi 0, %s137
      %s152 = sphi 0, %s138
      %s156 = sphi 0, %s156
      %s158 = sphi 0, %s156
      %s159 = sphi 0, %s158
      %s173 = sphi 0, %s159
      %s177 = sphi 0, %s177
      %s179 = sphi 0, %s177
      %s180 = sphi 0, %s179
      %s194 = sphi 0, %s180
      %s198 = sphi 0, %s198
      %s200 = sphi 0, %s198
      %s201 = sphi 0, %s200
      %s215 = sphi 0, %s201
      %s221 = sphi 0, %s223
      %s224 = sphi 0, %s221
      %s225 = sphi 0, %s224
      %s241 = sphi 0, %s225
    $region4: #{gnn_policy_forward_seq.1} parent=1 // loop_header_branch
      %20 = sbr.rel (%p18) target = $region8
    $region5: #{gnn_policy_forward_seq.1} parent=1 // loop_body
      %s22 = ssub.s32 %s17, 1
      %s23 = ssub.s32 %s17, 2
      %s24 = sadd.s32 %s17, 1
      %s25 = ssub.s32 %s17, %s24
      %p26 = scmp.eq.s32.totalorder %s25, 0
      %s28 = sadd.s32 %s27, 1
      %s29 = scalar_select %p26, %s27, %s28
      %p32 = pneg %p26
      %p33 = scmp.eq.s32.totalorder %s17, 7
      %p34 = por %p32, %p33
      %p35 = scmp.ne.s32.totalorder %s27, %s30
      %p36 = scmp.eq.s32.totalorder %s17, 0
      %p37 = por %p35, %p36
      %p38 = scmp.ne.s32.totalorder %s27, %s30
      %p39 = scmp.eq.s32.totalorder %s22, 7
      %p40 = por %p38, %p39
      %p41 = scmp.ne.s32.totalorder %s30, %s31
      %p42 = scmp.eq.s32.totalorder %s22, 0
      %p43 = por %p41, %p42
      %p44 = scmp.ne.s32.totalorder %s30, %s31
      %p45 = scmp.eq.s32.totalorder %s23, 7
      %p46 = por %p44, %p45
      %p48 = scmp.ne.s32.totalorder %s31, %s47
      %p49 = scmp.eq.s32.totalorder %s23, 0
      %p50 = por %p48, %p49
      %s52 = sadd.s32 %s51, 1
      %p55 = scmp.eq.s32.totalorder %s17, 7
      %p56 = scmp.ne.s32.totalorder %s51, %s53
      %p57 = scmp.eq.s32.totalorder %s17, 0
      %p58 = por %p56, %p57
      %p59 = scmp.ne.s32.totalorder %s51, %s53
      %p60 = scmp.eq.s32.totalorder %s22, 7
      %p61 = por %p59, %p60
      %p62 = scmp.ne.s32.totalorder %s53, %s54
      %p63 = scmp.eq.s32.totalorder %s22, 0
      %p64 = por %p62, %p63
      %p65 = scmp.ne.s32.totalorder %s53, %s54
      %p66 = scmp.eq.s32.totalorder %s23, 7
      %p67 = por %p65, %p66
      %p69 = scmp.ne.s32.totalorder %s54, %s68
      %p70 = scmp.eq.s32.totalorder %s23, 0
      %p71 = por %p69, %p70
      %s73 = sadd.s32 %s72, 1
      %p76 = scmp.eq.s32.totalorder %s17, 7
      %p77 = scmp.ne.s32.totalorder %s72, %s74
      %p78 = scmp.eq.s32.totalorder %s17, 0
      %p79 = por %p77, %p78
      %p80 = scmp.ne.s32.totalorder %s72, %s74
      %p81 = scmp.eq.s32.totalorder %s22, 7
      %p82 = por %p80, %p81
      %p83 = scmp.ne.s32.totalorder %s74, %s75
      %p84 = scmp.eq.s32.totalorder %s22, 0
      %p85 = por %p83, %p84
      %p86 = scmp.ne.s32.totalorder %s74, %s75
      %p87 = scmp.eq.s32.totalorder %s23, 7
      %p88 = por %p86, %p87
      %p90 = scmp.ne.s32.totalorder %s75, %s89
      %p91 = scmp.eq.s32.totalorder %s23, 0
      %p92 = por %p90, %p91
      %s94 = sadd.s32 %s93, 1
      %p97 = scmp.eq.s32.totalorder %s17, 7
      %p98 = scmp.ne.s32.totalorder %s93, %s95
      %p99 = scmp.eq.s32.totalorder %s17, 0
      %p100 = por %p98, %p99
      %p101 = scmp.ne.s32.totalorder %s93, %s95
      %p102 = scmp.eq.s32.totalorder %s22, 7
      %p103 = por %p101, %p102
      %p104 = scmp.ne.s32.totalorder %s95, %s96
      %p105 = scmp.eq.s32.totalorder %s22, 0
      %p106 = por %p104, %p105
      %p107 = scmp.ne.s32.totalorder %s95, %s96
      %p108 = scmp.eq.s32.totalorder %s23, 7
      %p109 = por %p107, %p108
      %p111 = scmp.ne.s32.totalorder %s96, %s110
      %p112 = scmp.eq.s32.totalorder %s23, 0
      %p113 = por %p111, %p112
      %s115 = sadd.s32 %s114, 1
      %p118 = scmp.eq.s32.totalorder %s17, 7
      %p119 = scmp.ne.s32.totalorder %s114, %s116
      %p120 = scmp.eq.s32.totalorder %s17, 0
      %p121 = por %p119, %p120
      %p122 = scmp.ne.s32.totalorder %s114, %s116
      %p123 = scmp.eq.s32.totalorder %s22, 7
      %p124 = por %p122, %p123
      %p125 = scmp.ne.s32.totalorder %s116, %s117
      %p126 = scmp.eq.s32.totalorder %s22, 0
      %p127 = por %p125, %p126
      %p128 = scmp.ne.s32.totalorder %s116, %s117
      %p129 = scmp.eq.s32.totalorder %s23, 7
      %p130 = por %p128, %p129
      %p132 = scmp.ne.s32.totalorder %s117, %s131
      %p133 = scmp.eq.s32.totalorder %s23, 0
      %p134 = por %p132, %p133
      %s136 = sadd.s32 %s135, 1
      %p139 = scmp.eq.s32.totalorder %s17, 7
      %p140 = scmp.ne.s32.totalorder %s135, %s137
      %p141 = scmp.eq.s32.totalorder %s17, 0
      %p142 = por %p140, %p141
      %p143 = scmp.ne.s32.totalorder %s135, %s137
      %p144 = scmp.eq.s32.totalorder %s22, 7
      %p145 = por %p143, %p144
      %p146 = scmp.ne.s32.totalorder %s137, %s138
      %p147 = scmp.eq.s32.totalorder %s22, 0
      %p148 = por %p146, %p147
      %p149 = scmp.ne.s32.totalorder %s137, %s138
      %p150 = scmp.eq.s32.totalorder %s23, 7
      %p151 = por %p149, %p150
      %p153 = scmp.ne.s32.totalorder %s138, %s152
      %p154 = scmp.eq.s32.totalorder %s23, 0
      %p155 = por %p153, %p154
      %s157 = sadd.s32 %s156, 1
      %p160 = scmp.eq.s32.totalorder %s17, 7
      %p161 = scmp.ne.s32.totalorder %s156, %s158
      %p162 = scmp.eq.s32.totalorder %s17, 0
      %p163 = por %p161, %p162
      %p164 = scmp.ne.s32.totalorder %s156, %s158
      %p165 = scmp.eq.s32.totalorder %s22, 7
      %p166 = por %p164, %p165
      %p167 = scmp.ne.s32.totalorder %s158, %s159
      %p168 = scmp.eq.s32.totalorder %s22, 0
      %p169 = por %p167, %p168
      %p170 = scmp.ne.s32.totalorder %s158, %s159
      %p171 = scmp.eq.s32.totalorder %s23, 7
      %p172 = por %p170, %p171
      %p174 = scmp.ne.s32.totalorder %s159, %s173
      %p175 = scmp.eq.s32.totalorder %s23, 0
      %p176 = por %p174, %p175
      %s178 = sadd.s32 %s177, 1
      %p181 = scmp.eq.s32.totalorder %s17, 7
      %p182 = scmp.ne.s32.totalorder %s177, %s179
      %p183 = scmp.eq.s32.totalorder %s17, 0
      %p184 = por %p182, %p183
      %p185 = scmp.ne.s32.totalorder %s177, %s179
      %p186 = scmp.eq.s32.totalorder %s22, 7
      %p187 = por %p185, %p186
      %p188 = scmp.ne.s32.totalorder %s179, %s180
      %p189 = scmp.eq.s32.totalorder %s22, 0
      %p190 = por %p188, %p189
      %p191 = scmp.ne.s32.totalorder %s179, %s180
      %p192 = scmp.eq.s32.totalorder %s23, 7
      %p193 = por %p191, %p192
      %p195 = scmp.ne.s32.totalorder %s180, %s194
      %p196 = scmp.eq.s32.totalorder %s23, 0
      %p197 = por %p195, %p196
      %s199 = sadd.s32 %s198, 1
      %p202 = scmp.eq.s32.totalorder %s17, 7
      %p203 = scmp.ne.s32.totalorder %s198, %s200
      %p204 = scmp.eq.s32.totalorder %s17, 0
      %p205 = por %p203, %p204
      %p206 = scmp.ne.s32.totalorder %s198, %s200
      %p207 = scmp.eq.s32.totalorder %s22, 7
      %p208 = por %p206, %p207
      %p209 = scmp.ne.s32.totalorder %s200, %s201
      %p210 = scmp.eq.s32.totalorder %s22, 0
      %p211 = por %p209, %p210
      %p212 = scmp.ne.s32.totalorder %s200, %s201
      %p213 = scmp.eq.s32.totalorder %s23, 7
      %p214 = por %p212, %p213
      %p216 = scmp.ne.s32.totalorder %s201, %s215
      %p217 = scmp.eq.s32.totalorder %s23, 0
      %p218 = por %p216, %p217
      %s219 = ssub.s32 %s17, %s24
      %p220 = scmp.eq.s32.totalorder %s219, 0
      %s222 = sadd.s32 %s221, 1
      %s223 = scalar_select %p220, %s221, %s222
      %p226 = pneg %p220
      %p227 = scmp.eq.s32.totalorder %s17, 7
      %p228 = por %p226, %p227
      %p229 = scmp.ne.s32.totalorder %s221, %s224
      %p230 = scmp.eq.s32.totalorder %s17, 0
      %p231 = por %p229, %p230
      %p232 = scmp.ne.s32.totalorder %s221, %s224
      %p233 = scmp.eq.s32.totalorder %s22, 7
      %p234 = por %p232, %p233
      %p235 = scmp.ne.s32.totalorder %s224, %s225
      %p236 = scmp.eq.s32.totalorder %s22, 0
      %p237 = por %p235, %p236
      %p238 = scmp.ne.s32.totalorder %s224, %s225
      %p239 = scmp.eq.s32.totalorder %s23, 7
      %p240 = por %p238, %p239
      %p242 = scmp.ne.s32.totalorder %s225, %s241
      %p243 = scmp.eq.s32.totalorder %s23, 0
      %p244 = por %p242, %p243
      %p245 = scmp.le.s32.totalorder 1, %s17
      %p246 = scmp.lt.s32.totalorder %s17, 9
      %p247 = pnand %p245, %p246
      %p248 = pneg %p247
      // Predicated region
      $region9: #{gnn_policy_forward_seq.1} parent=5 // pred_check
        _
      $region10: #{gnn_policy_forward_seq.1} parent=5 // pred_check_branch
        %250 = sbr.rel (%p247) target = $region12
      $region11: #{gnn_policy_forward_seq.1} parent=5 // pred_region
        %s251 = ssub.s32 %s17, 1
        // Predicated region
        $region13: #{gnn_policy_forward_seq.1} parent=11 // pred_check
          %p252 = pneg %p64
        $region14: #{gnn_policy_forward_seq.1} parent=11 // pred_check_branch
          %254 = sbr.rel (%p252) target = $region16
        $region15: #{gnn_policy_forward_seq.1} parent=11 // pred_region
          _
        $region16: #{gnn_policy_forward_seq.1} parent=11 // pred_fallthru
          _
        // Predicated region
        $region17: #{gnn_policy_forward_seq.1} parent=11 // pred_check
          %p255 = pneg %p85
        $region18: #{gnn_policy_forward_seq.1} parent=11 // pred_check_branch
          %257 = sbr.rel (%p255) target = $region20
        $region19: #{gnn_policy_forward_seq.1} parent=11 // pred_region
          %s259 = ssub.s32 32, 32
          %260 = vsyncadd [#allocation5], %s259
          %s262 = sshll.u32 [#allocation4], 4
          %s263 = int_to_ptr.vmem [resolvable:$true] %s262
          %265 = dma.hbm_to_vmem [thread:$0]  %s2, 32, %s263, [#allocation5]
        $region20: #{gnn_policy_forward_seq.1} parent=11 // pred_fallthru
          _
        // Predicated region
        $region21: #{gnn_policy_forward_seq.1} parent=11 // pred_check
          %p266 = pneg %p106
        $region22: #{gnn_policy_forward_seq.1} parent=11 // pred_check_branch
          %268 = sbr.rel (%p266) target = $region24
        $region23: #{gnn_policy_forward_seq.1} parent=11 // pred_region
          _
        $region24: #{gnn_policy_forward_seq.1} parent=11 // pred_fallthru
          _
        // Predicated region
        $region25: #{gnn_policy_forward_seq.1} parent=11 // pred_check
          %p269 = pneg %p127
        $region26: #{gnn_policy_forward_seq.1} parent=11 // pred_check_branch
          %271 = sbr.rel (%p269) target = $region28
        $region27: #{gnn_policy_forward_seq.1} parent=11 // pred_region
          _
        $region28: #{gnn_policy_forward_seq.1} parent=11 // pred_fallthru
          _
        // Predicated region
        $region29: #{gnn_policy_forward_seq.1} parent=11 // pred_check
          %p272 = pneg %p148
        $region30: #{gnn_policy_forward_seq.1} parent=11 // pred_check_branch
          %274 = sbr.rel (%p272) target = $region32
        $region31: #{gnn_policy_forward_seq.1} parent=11 // pred_region
          _
        $region32: #{gnn_policy_forward_seq.1} parent=11 // pred_fallthru
          _
        // Predicated region
        $region33: #{gnn_policy_forward_seq.1} parent=11 // pred_check
          %p275 = pneg %p169
        $region34: #{gnn_policy_forward_seq.1} parent=11 // pred_check_branch
          %277 = sbr.rel (%p275) target = $region36
        $region35: #{gnn_policy_forward_seq.1} parent=11 // pred_region
          _
        $region36: #{gnn_policy_forward_seq.1} parent=11 // pred_fallthru
          _
        // Predicated region
        $region37: #{gnn_policy_forward_seq.1} parent=11 // pred_check
          %p278 = pneg %p190
        $region38: #{gnn_policy_forward_seq.1} parent=11 // pred_check_branch
          %280 = sbr.rel (%p278) target = $region40
        $region39: #{gnn_policy_forward_seq.1} parent=11 // pred_region
          %s282 = ssub.s32 64, 64
          %283 = vsyncadd [#allocation7], %s282
          %s285 = sshll.u32 [#allocation6], 4
          %s286 = int_to_ptr.vmem [resolvable:$true] %s285
          %288 = dma.hbm_to_vmem [thread:$0]  %s7, 64, %s286, [#allocation7]
        $region40: #{gnn_policy_forward_seq.1} parent=11 // pred_fallthru
          _
        // Predicated region
        $region41: #{gnn_policy_forward_seq.1} parent=11 // pred_check
          %p289 = pneg %p211
        $region42: #{gnn_policy_forward_seq.1} parent=11 // pred_check_branch
          %291 = sbr.rel (%p289) target = $region44
        $region43: #{gnn_policy_forward_seq.1} parent=11 // pred_region
          _
        $region44: #{gnn_policy_forward_seq.1} parent=11 // pred_fallthru
          _
      $region12: #{gnn_policy_forward_seq.1} parent=5 // pred_fallthru
        _
      %p292 = scmp.lt.s32.totalorder %s17, 8
      // Predicated region
      $region45: #{gnn_policy_forward_seq.1} parent=5 // pred_check
        %p293 = pneg %p292
      $region46: #{gnn_policy_forward_seq.1} parent=5 // pred_check_branch
        %295 = sbr.rel (%p293) target = $region48
      $region47: #{gnn_policy_forward_seq.1} parent=5 // pred_region
        // Predicated region
        $region49: #{gnn_policy_forward_seq.1} parent=47 // pred_check
          %p296 = pneg %p37
        $region50: #{gnn_policy_forward_seq.1} parent=47 // pred_check_branch
          %298 = sbr.rel (%p296) target = $region52
        $region51: #{gnn_policy_forward_seq.1} parent=47 // pred_region
          %p299 = scmp.lt.s32.totalorder %s17, 7
          %s300 = scalar_select %p299, %s17, 7
          %s301 = smul.addr %s300, 2
          %s302 = smul.addr %s301, 8
          %s303 = scalar_lea.vmem %s0, %s302
        $region52: #{gnn_policy_forward_seq.1} parent=47 // pred_fallthru
          _
      $region48: #{gnn_policy_forward_seq.1} parent=5 // pred_fallthru
        _
      %p304 = scmp.le.s32.totalorder 1, %s17
      %p305 = scmp.lt.s32.totalorder %s17, 9
      %p306 = pnand %p304, %p305
      %p307 = pneg %p306
      // Predicated region
      $region53: #{gnn_policy_forward_seq.1} parent=5 // pred_check
        _
      $region54: #{gnn_policy_forward_seq.1} parent=5 // pred_check_branch
        %309 = sbr.rel (%p306) target = $region56
      $region55: #{gnn_policy_forward_seq.1} parent=5 // pred_region
        %s310 = ssub.s32 %s17, 1
        // Predicated region
        $region57: #{gnn_policy_forward_seq.1} parent=55 // pred_check
          %p311 = pneg %p85
        $region58: #{gnn_policy_forward_seq.1} parent=55 // pred_check_branch
          %313 = sbr.rel (%p311) target = $region60
        $region59: #{gnn_policy_forward_seq.1} parent=55 // pred_region
          %314 = dma.done [#allocation5], 32
        $region60: #{gnn_policy_forward_seq.1} parent=55 // pred_fallthru
          _
        // Predicated region
        $region61: #{gnn_policy_forward_seq.1} parent=55 // pred_check
          %p315 = pneg %p190
        $region62: #{gnn_policy_forward_seq.1} parent=55 // pred_check_branch
          %317 = sbr.rel (%p315) target = $region64
        $region63: #{gnn_policy_forward_seq.1} parent=55 // pred_region
          %318 = dma.done [#allocation7], 64
        $region64: #{gnn_policy_forward_seq.1} parent=55 // pred_fallthru
          _
        %p319 = scmp.lt.s32.totalorder %s22, 7
        %s320 = scalar_select %p319, %s22, 7
        %s321 = smul.addr %s320, 2
        %s322 = smul.addr %s321, 8
        %s323 = scalar_lea.vmem %s0, %s322
        %p324 = pneg %p43
        %p325 = pneg %p40
        %p326 = pneg %p64
        %p327 = pneg %p61
        %p328 = pneg %p85
        %p329 = pneg %p82
        %p330 = pneg %p106
        %p331 = pneg %p103
        %p332 = pneg %p127
        %p333 = pneg %p124
        %p334 = pneg %p148
        %p335 = pneg %p145
        %p336 = pneg %p169
        %p337 = pneg %p166
        %p338 = pneg %p190
        %p339 = pneg %p187
        %p340 = pneg %p211
        %p341 = pneg %p208
        %p342 = pneg %p237
        %p343 = pneg %p234
        %p344 = scmp.lt.s32.totalorder %s22, 7
        %s345 = scalar_select %p344, %s22, 7
        %s346 = smul.addr %s345, 2
        %s347 = scalar_lea.vmem %s9, %s346
        %p348 = scmp.lt.s32.totalorder %s22, 7
        %s349 = scalar_select %p348, %s22, 7
        %s350 = smul.addr %s349, 2
        %s351 = smul.addr %s350, 8
        %s352 = scalar_lea.vmem %s0, %s351
        %p353 = scmp.lt.s32.totalorder %s22, 7
        %s354 = scalar_select %p353, %s22, 7
        %s355 = smul.addr %s354, 2
        %s356 = scalar_lea.vmem %s9, %s355
        %p357 = scmp.eq.s32.totalorder %s22, 0
        // Predicated region
        $region65: #{gnn_policy_forward_seq.1} parent=55 // pred_check
          %p358 = pneg %p357
        $region66: #{gnn_policy_forward_seq.1} parent=55 // pred_check_branch
          %360 = sbr.rel (%p358) target = $region68
        $region67: #{gnn_policy_forward_seq.1} parent=55 // pred_region
          %v361 = vld [vmem:[%s8] sm:$0x3]
          %vm362 = vcmask 254976
          %363 = vst.msk [vmem:[#allocation2] sm:$0x3] %vm362, %v361
          %v364 = vld [vmem:[%s8] sm:$0x3]
          %366 = vrot.lane.b32.xlu0 %v364, 96
          %v367 = vpop.permute.xlu0 %366
          %369 = vst.msk [vmem:[#allocation3] sm:$0x3] %vm362, %v367
        $region68: #{gnn_policy_forward_seq.1} parent=55 // pred_fallthru
          _
        %v370 = vld [vmem:[%s352] sm:$0xff]
        %v371 = vld [vmem:[%s352 + $0x8] sm:$0xff]
        %v372 = vld [vmem:[%s1] sm:$0xff]
        %v373 = vld [vmem:[%s1 + $0x8] sm:$0xff]
        %v374 = vld [vmem:[#allocation6] sm:$0x1]
        %v375 = vld [vmem:[#allocation6 + $0x1] sm:$0x1]
        %v376 = vld [vmem:[#allocation6 + $0x2] sm:$0x1]
        %vm377 = vcmask 130048
        %v379 = vsel %vm377, %v372, 0
        %v382 = vsel %vm377, %v373, 0
        %384 = vmatprep.subr.mxu0 0.0
        %385 = vmatpush1.msra.mxu0 %v370
        %386 = vmatprep.subr.mxu0 0.0
        %387 = vmatpush1.msra.mxu0 %v371
        %388 = vmatprep.subr.mxu0 0.0
        %389 = vmatpush1.msra.mxu0 0.0
        %390 = vmatprep.subr.mxu0 0.0
        %391 = vmatpush1.msra.mxu0 0.0
        %392 = vmatprep.subr.mxu0 0.0
        %393 = vmatpush1.msra.mxu0 0.0
        %394 = vmatprep.subr.mxu0 0.0
        %395 = vmatpush1.msra.mxu0 0.0
        %396 = vmatprep.subr.mxu0 0.0
        %397 = vmatpush1.msra.mxu0 0.0
        %398 = vmatprep.subr.mxu0 0.0
        %399 = vmatpush1.msra.mxu0 0.0
        %400 = vmatprep.subr.mxu0 0.0
        %401 = vmatpush1.msra.mxu0 0.0
        %402 = vmatprep.subr.mxu0 0.0
        %403 = vmatpush1.msra.mxu0 0.0
        %404 = vmatprep.subr.mxu0 0.0
        %405 = vmatpush1.msra.mxu0 0.0
        %406 = vmatprep.subr.mxu0 0.0
        %407 = vmatpush1.msra.mxu0 0.0
        %408 = vmatprep.subr.mxu0 0.0
        %409 = vmatpush1.msra.mxu0 0.0
        %410 = vmatprep.subr.mxu0 0.0
        %411 = vmatpush1.msra.mxu0 0.0
        %412 = vmatprep.subr.mxu0 0.0
        %413 = vmatpush1.msra.mxu0 0.0
        %414 = vmatprep.subr.mxu0 0.0
        %415 = vmatpush1.msra.mxu0 0.0
        %416 = vmatprep.subr.mxu0 0.0
        %417 = vmatpush1.msra.mxu0 0.0
        %418 = vmatprep.subr.mxu0 0.0
        %419 = vmatpush1.msra.mxu0 0.0
        %420 = vmatprep.subr.mxu0 0.0
        %421 = vmatpush1.msra.mxu0 0.0
        %422 = vmatprep.subr.mxu0 0.0
        %423 = vmatpush1.msra.mxu0 0.0
        %424 = vmatprep.subr.mxu0 0.0
        %425 = vmatpush1.msra.mxu0 0.0
        %426 = vmatprep.subr.mxu0 0.0
        %427 = vmatpush1.msra.mxu0 0.0
        %428 = vmatprep.subr.mxu0 0.0
        %429 = vmatpush1.msra.mxu0 0.0
        %430 = vmatprep.subr.mxu0 0.0
        %431 = vmatpush1.msra.mxu0 0.0
        %432 = vmatprep.subr.mxu0 0.0
        %433 = vmatpush1.msra.mxu0 0.0
        %434 = vmatprep.subr.mxu0 0.0
        %435 = vmatpush1.msra.mxu0 0.0
        %436 = vmatprep.subr.mxu0 0.0
        %437 = vmatpush1.msra.mxu0 0.0
        %438 = vmatprep.subr.mxu0 0.0
        %439 = vmatpush1.msra.mxu0 0.0
        %440 = vmatprep.subr.mxu0 0.0
        %441 = vmatpush1.msra.mxu0 0.0
        %442 = vmatprep.subr.mxu0 0.0
        %443 = vmatpush1.msra.mxu0 0.0
        %444 = vmatprep.subr.mxu0 0.0
        %445 = vmatpush1.msra.mxu0 0.0
        %446 = vmatprep.subr.mxu0 0.0
        %447 = vmatpush1.msra.mxu0 0.0
        %448 = vmatprep.mubr.f32.mxu0 0.0
        %449 = vmatmul.mubr.f32.gmra.mrb[0].mxu0 %v379
        %v450 = vpop.f32.mrb[0].mxu0
        %v451 = vadd.f32 0.0, %v450
        %v452 = vpop.f32.mrb[0].mxu0
        %453 = vmatprep.mubr.f32.mxu0 0.0
        %454 = vmatmul.mubr.f32.gmra.mrb[0].mxu0 %v382
        %v455 = vpop.f32.mrb[0].mxu0
        %v456 = vadd.f32 0.0, %v455
        %v457 = vpop.f32.mrb[0].mxu0
        %458 = vdwg.mxu0
        %v459 = vld [vmem:[%s3] sm:$0xff]
        %v460 = vlaneseq
        %v461 = vshrl.u32 %v460, 7
        %v462 = vsub.s32 0, %v461
        %v463 = vrot.slane %v374, %v462
        %vm464 = vcmask 64512
        %v466 = vsel %vm464, %v451, 0
        %v469 = vsel %vm464, %v456, 0
        %471 = vmatprep.subr.mxu0 0.0
        %472 = vmatpush1.msra.mxu0 %v459
        %473 = vmatprep.subr.mxu0 0.0
        %474 = vmatpush1.msra.mxu0 0.0
        %475 = vmatprep.subr.mxu0 0.0
        %476 = vmatpush1.msra.mxu0 0.0
        %477 = vmatprep.subr.mxu0 0.0
        %478 = vmatpush1.msra.mxu0 0.0
        %479 = vmatprep.subr.mxu0 0.0
        %480 = vmatpush1.msra.mxu0 0.0
        %481 = vmatprep.subr.mxu0 0.0
        %482 = vmatpush1.msra.mxu0 0.0
        %483 = vmatprep.subr.mxu0 0.0
        %484 = vmatpush1.msra.mxu0 0.0
        %485 = vmatprep.subr.mxu0 0.0
        %486 = vmatpush1.msra.mxu0 0.0
        %487 = vmatprep.subr.mxu0 0.0
        %488 = vmatpush1.msra.mxu0 0.0
        %489 = vmatprep.subr.mxu0 0.0
        %490 = vmatpush1.msra.mxu0 0.0
        %491 = vmatprep.subr.mxu0 0.0
        %492 = vmatpush1.msra.mxu0 0.0
        %493 = vmatprep.subr.mxu0 0.0
        %494 = vmatpush1.msra.mxu0 0.0
        %495 = vmatprep.subr.mxu0 0.0
        %496 = vmatpush1.msra.mxu0 0.0
        %497 = vmatprep.subr.mxu0 0.0
        %498 = vmatpush1.msra.mxu0 0.0
        %499 = vmatprep.subr.mxu0 0.0
        %500 = vmatpush1.msra.mxu0 0.0
        %501 = vmatprep.subr.mxu0 0.0
        %502 = vmatpush1.msra.mxu0 0.0
        %503 = vmatprep.subr.mxu0 0.0
        %504 = vmatpush1.msra.mxu0 0.0
        %505 = vmatprep.subr.mxu0 0.0
        %506 = vmatpush1.msra.mxu0 0.0
        %507 = vmatprep.subr.mxu0 0.0
        %508 = vmatpush1.msra.mxu0 0.0
        %509 = vmatprep.subr.mxu0 0.0
        %510 = vmatpush1.msra.mxu0 0.0
        %511 = vmatprep.subr.mxu0 0.0
        %512 = vmatpush1.msra.mxu0 0.0
        %513 = vmatprep.subr.mxu0 0.0
        %514 = vmatpush1.msra.mxu0 0.0
        %515 = vmatprep.subr.mxu0 0.0
        %516 = vmatpush1.msra.mxu0 0.0
        %517 = vmatprep.subr.mxu0 0.0
        %518 = vmatpush1.msra.mxu0 0.0
        %519 = vmatprep.subr.mxu0 0.0
        %520 = vmatpush1.msra.mxu0 0.0
        %521 = vmatprep.subr.mxu0 0.0
        %522 = vmatpush1.msra.mxu0 0.0
        %523 = vmatprep.subr.mxu0 0.0
        %524 = vmatpush1.msra.mxu0 0.0
        %525 = vmatprep.subr.mxu0 0.0
        %526 = vmatpush1.msra.mxu0 0.0
        %527 = vmatprep.subr.mxu0 0.0
        %528 = vmatpush1.msra.mxu0 0.0
        %529 = vmatprep.subr.mxu0 0.0
        %530 = vmatpush1.msra.mxu0 0.0
        %531 = vmatprep.subr.mxu0 0.0
        %532 = vmatpush1.msra.mxu0 0.0
        %533 = vmatprep.subr.mxu0 0.0
        %534 = vmatpush1.msra.mxu0 0.0
        %535 = vmatprep.mubr.f32.mxu0 0.0
        %536 = vmatmul.mubr.f32.gmra.mrb[0].mxu0 %v466
        %v537 = vpop.f32.mrb[0].mxu0
        %v538 = vadd.f32 %v463, %v537
        %v539 = vpop.f32.mrb[0].mxu0
        %540 = vmatprep.mubr.f32.mxu0 0.0
        %541 = vmatmul.mubr.f32.gmra.mrb[0].mxu0 %v469
        %v542 = vpop.f32.mrb[0].mxu0
        %v543 = vadd.f32 %v463, %v542
        %v544 = vpop.f32.mrb[0].mxu0
        %545 = vdwg.mxu0
        %v546 = vmax.f32 %v538, 0.0
        %v547 = vmax.f32 %v543, 0.0
        %v548 = vld [vmem:[%s4] sm:$0xff]
        %v549 = vld [vmem:[%s4 + $0x8] sm:$0xff]
        %v550 = vld [vmem:[%s4 + $0x10] sm:$0xff]
        %v551 = vld [vmem:[%s4 + $0x18] sm:$0xff]
        %553 = vrot.lane.b32.xlu0 %v463, 96
        %v554 = vpop.permute.xlu0 %553
        %vm556 = vcmask 261120
        %v558 = vsel %vm556, %v546, 0
        %v561 = vsel %vm556, %v547, 0
        %563 = vmatprep.subr.mxu0 0.0
        %564 = vmatpush1.msra.mxu0 %v548
        %565 = vmatprep.subr.mxu0 0.0
        %566 = vmatpush1.msra.mxu0 %v549
        %567 = vmatprep.subr.mxu0 0.0
        %568 = vmatpush1.msra.mxu0 %v550
        %569 = vmatprep.subr.mxu0 0.0
        %570 = vmatpush1.msra.mxu0 %v551
        %571 = vmatprep.subr.mxu0 0.0
        %572 = vmatpush1.msra.mxu0 0.0
        %573 = vmatprep.subr.mxu0 0.0
        %574 = vmatpush1.msra.mxu0 0.0
        %575 = vmatprep.subr.mxu0 0.0
        %576 = vmatpush1.msra.mxu0 0.0
        %577 = vmatprep.subr.mxu0 0.0
        %578 = vmatpush1.msra.mxu0 0.0
        %579 = vmatprep.subr.mxu0 0.0
        %580 = vmatpush1.msra.mxu0 0.0
        %581 = vmatprep.subr.mxu0 0.0
        %582 = vmatpush1.msra.mxu0 0.0
        %583 = vmatprep.subr.mxu0 0.0
        %584 = vmatpush1.msra.mxu0 0.0
        %585 = vmatprep.subr.mxu0 0.0
        %586 = vmatpush1.msra.mxu0 0.0
        %587 = vmatprep.subr.mxu0 0.0
        %588 = vmatpush1.msra.mxu0 0.0
        %589 = vmatprep.subr.mxu0 0.0
        %590 = vmatpush1.msra.mxu0 0.0
        %591 = vmatprep.subr.mxu0 0.0
        %592 = vmatpush1.msra.mxu0 0.0
        %593 = vmatprep.subr.mxu0 0.0
        %594 = vmatpush1.msra.mxu0 0.0
        %595 = vmatprep.subr.mxu0 0.0
        %596 = vmatpush1.msra.mxu0 0.0
        %597 = vmatprep.subr.mxu0 0.0
        %598 = vmatpush1.msra.mxu0 0.0
        %599 = vmatprep.subr.mxu0 0.0
        %600 = vmatpush1.msra.mxu0 0.0
        %601 = vmatprep.subr.mxu0 0.0
        %602 = vmatpush1.msra.mxu0 0.0
        %603 = vmatprep.subr.mxu0 0.0
        %604 = vmatpush1.msra.mxu0 0.0
        %605 = vmatprep.subr.mxu0 0.0
        %606 = vmatpush1.msra.mxu0 0.0
        %607 = vmatprep.subr.mxu0 0.0
        %608 = vmatpush1.msra.mxu0 0.0
        %609 = vmatprep.subr.mxu0 0.0
        %610 = vmatpush1.msra.mxu0 0.0
        %611 = vmatprep.subr.mxu0 0.0
        %612 = vmatpush1.msra.mxu0 0.0
        %613 = vmatprep.subr.mxu0 0.0
        %614 = vmatpush1.msra.mxu0 0.0
        %615 = vmatprep.subr.mxu0 0.0
        %616 = vmatpush1.msra.mxu0 0.0
        %617 = vmatprep.subr.mxu0 0.0
        %618 = vmatpush1.msra.mxu0 0.0
        %619 = vmatprep.subr.mxu0 0.0
        %620 = vmatpush1.msra.mxu0 0.0
        %621 = vmatprep.subr.mxu0 0.0
        %622 = vmatpush1.msra.mxu0 0.0
        %623 = vmatprep.subr.mxu0 0.0
        %624 = vmatpush1.msra.mxu0 0.0
        %625 = vmatprep.subr.mxu0 0.0
        %626 = vmatpush1.msra.mxu0 0.0
        %627 = vmatprep.mubr.f32.mxu0 0.0
        %628 = vmatmul.mubr.f32.gmra.mrb[0].mxu0 %v558
        %v629 = vpop.f32.mrb[0].mxu0
        %v630 = vadd.f32 %v554, %v629
        %v631 = vpop.f32.mrb[0].mxu0
        %632 = vmatprep.mubr.f32.mxu0 0.0
        %633 = vmatmul.mubr.f32.gmra.mrb[0].mxu0 %v561
        %v634 = vpop.f32.mrb[0].mxu0
        %v635 = vadd.f32 %v554, %v634
        %v636 = vpop.f32.mrb[0].mxu0
        %637 = vdwg.mxu0
        %v638 = vmax.f32 %v630, 0.0
        %v639 = vmax.f32 %v635, 0.0
        %640 = vmatprep.subr.mxu0 0.0
        %641 = vmatpush1.msra.mxu0 %v638
        %642 = vmatprep.subr.mxu0 0.0
        %643 = vmatpush1.msra.mxu0 %v639
        %644 = vmatprep.subr.mxu0 0.0
        %645 = vmatpush1.msra.mxu0 0.0
        %646 = vmatprep.subr.mxu0 0.0
        %647 = vmatpush1.msra.mxu0 0.0
        %648 = vmatprep.subr.mxu0 0.0
        %649 = vmatpush1.msra.mxu0 0.0
        %650 = vmatprep.subr.mxu0 0.0
        %651 = vmatpush1.msra.mxu0 0.0
        %652 = vmatprep.subr.mxu0 0.0
        %653 = vmatpush1.msra.mxu0 0.0
        %654 = vmatprep.subr.mxu0 0.0
        %655 = vmatpush1.msra.mxu0 0.0
        %656 = vmatprep.subr.mxu0 0.0
        %657 = vmatpush1.msra.mxu0 0.0
        %658 = vmatprep.subr.mxu0 0.0
        %659 = vmatpush1.msra.mxu0 0.0
        %660 = vmatprep.subr.mxu0 0.0
        %661 = vmatpush1.msra.mxu0 0.0
        %662 = vmatprep.subr.mxu0 0.0
        %663 = vmatpush1.msra.mxu0 0.0
        %664 = vmatprep.subr.mxu0 0.0
        %665 = vmatpush1.msra.mxu0 0.0
        %666 = vmatprep.subr.mxu0 0.0
        %667 = vmatpush1.msra.mxu0 0.0
        %668 = vmatprep.subr.mxu0 0.0
        %669 = vmatpush1.msra.mxu0 0.0
        %670 = vmatprep.subr.mxu0 0.0
        %671 = vmatpush1.msra.mxu0 0.0
        %672 = vmatprep.subr.mxu0 0.0
        %673 = vmatpush1.msra.mxu0 0.0
        %674 = vmatprep.subr.mxu0 0.0
        %675 = vmatpush1.msra.mxu0 0.0
        %676 = vmatprep.subr.mxu0 0.0
        %677 = vmatpush1.msra.mxu0 0.0
        %678 = vmatprep.subr.mxu0 0.0
        %679 = vmatpush1.msra.mxu0 0.0
        %680 = vmatprep.subr.mxu0 0.0
        %681 = vmatpush1.msra.mxu0 0.0
        %682 = vmatprep.subr.mxu0 0.0
        %683 = vmatpush1.msra.mxu0 0.0
        %684 = vmatprep.subr.mxu0 0.0
        %685 = vmatpush1.msra.mxu0 0.0
        %686 = vmatprep.subr.mxu0 0.0
        %687 = vmatpush1.msra.mxu0 0.0
        %688 = vmatprep.subr.mxu0 0.0
        %689 = vmatpush1.msra.mxu0 0.0
        %690 = vmatprep.subr.mxu0 0.0
        %691 = vmatpush1.msra.mxu0 0.0
        %692 = vmatprep.subr.mxu0 0.0
        %693 = vmatpush1.msra.mxu0 0.0
        %694 = vmatprep.subr.mxu0 0.0
        %695 = vmatpush1.msra.mxu0 0.0
        %696 = vmatprep.subr.mxu0 0.0
        %697 = vmatpush1.msra.mxu0 0.0
        %698 = vmatprep.subr.mxu0 0.0
        %699 = vmatpush1.msra.mxu0 0.0
        %700 = vmatprep.subr.mxu0 0.0
        %701 = vmatpush1.msra.mxu0 0.0
        %702 = vmatprep.subr.mxu0 0.0
        %703 = vmatpush1.msra.mxu0 0.0
        %704 = vmatprep.mubr.f32.mxu0 0.0
        %705 = vmatmul.mubr.f32.gmra.mrb[0].mxu0 %v379
        %v706 = vpop.f32.mrb[0].mxu0
        %v707 = vadd.f32 0.0, %v706
        %v708 = vpop.f32.mrb[0].mxu0
        %709 = vmatprep.mubr.f32.mxu0 0.0
        %710 = vmatmul.mubr.f32.gmra.mrb[0].mxu0 %v382
        %v711 = vpop.f32.mrb[0].mxu0
        %v712 = vadd.f32 0.0, %v711
        %v713 = vpop.f32.mrb[0].mxu0
        %714 = vdwg.mxu0
        %s715 = scalar_lea.vmem %s4, 32
        %v716 = vld [vmem:[%s715] sm:$0xff]
        %v717 = vld [vmem:[%s715 + $0x8] sm:$0xff]
        %v718 = vld [vmem:[%s715 + $0x10] sm:$0xff]
        %v719 = vld [vmem:[%s715 + $0x18] sm:$0xff]
        %720 = vrot.lane.b32.xlu0 %v463, 64
        %v721 = vpop.permute.xlu0 %720
        %v724 = vsel %vm556, %v707, 0
        %v727 = vsel %vm556, %v712, 0
        %729 = vmatprep.subr.mxu0 0.0
        %730 = vmatpush1.msra.mxu0 %v716
        %731 = vmatprep.subr.mxu0 0.0
        %732 = vmatpush1.msra.mxu0 %v717
        %733 = vmatprep.subr.mxu0 0.0
        %734 = vmatpush1.msra.mxu0 %v718
        %735 = vmatprep.subr.mxu0 0.0
        %736 = vmatpush1.msra.mxu0 %v719
        %737 = vmatprep.subr.mxu0 0.0
        %738 = vmatpush1.msra.mxu0 0.0
        %739 = vmatprep.subr.mxu0 0.0
        %740 = vmatpush1.msra.mxu0 0.0
        %741 = vmatprep.subr.mxu0 0.0
        %742 = vmatpush1.msra.mxu0 0.0
        %743 = vmatprep.subr.mxu0 0.0
        %744 = vmatpush1.msra.mxu0 0.0
        %745 = vmatprep.subr.mxu0 0.0
        %746 = vmatpush1.msra.mxu0 0.0
        %747 = vmatprep.subr.mxu0 0.0
        %748 = vmatpush1.msra.mxu0 0.0
        %749 = vmatprep.subr.mxu0 0.0
        %750 = vmatpush1.msra.mxu0 0.0
        %751 = vmatprep.subr.mxu0 0.0
        %752 = vmatpush1.msra.mxu0 0.0
        %753 = vmatprep.subr.mxu0 0.0
        %754 = vmatpush1.msra.mxu0 0.0
        %755 = vmatprep.subr.mxu0 0.0
        %756 = vmatpush1.msra.mxu0 0.0
        %757 = vmatprep.subr.mxu0 0.0
        %758 = vmatpush1.msra.mxu0 0.0
        %759 = vmatprep.subr.mxu0 0.0
        %760 = vmatpush1.msra.mxu0 0.0
        %761 = vmatprep.subr.mxu0 0.0
        %762 = vmatpush1.msra.mxu0 0.0
        %763 = vmatprep.subr.mxu0 0.0
        %764 = vmatpush1.msra.mxu0 0.0
        %765 = vmatprep.subr.mxu0 0.0
        %766 = vmatpush1.msra.mxu0 0.0
        %767 = vmatprep.subr.mxu0 0.0
        %768 = vmatpush1.msra.mxu0 0.0
        %769 = vmatprep.subr.mxu0 0.0
        %770 = vmatpush1.msra.mxu0 0.0
        %771 = vmatprep.subr.mxu0 0.0
        %772 = vmatpush1.msra.mxu0 0.0
        %773 = vmatprep.subr.mxu0 0.0
        %774 = vmatpush1.msra.mxu0 0.0
        %775 = vmatprep.subr.mxu0 0.0
        %776 = vmatpush1.msra.mxu0 0.0
        %777 = vmatprep.subr.mxu0 0.0
        %778 = vmatpush1.msra.mxu0 0.0
        %779 = vmatprep.subr.mxu0 0.0
        %780 = vmatpush1.msra.mxu0 0.0
        %781 = vmatprep.subr.mxu0 0.0
        %782 = vmatpush1.msra.mxu0 0.0
        %783 = vmatprep.subr.mxu0 0.0
        %784 = vmatpush1.msra.mxu0 0.0
        %785 = vmatprep.subr.mxu0 0.0
        %786 = vmatpush1.msra.mxu0 0.0
        %787 = vmatprep.subr.mxu0 0.0
        %788 = vmatpush1.msra.mxu0 0.0
        %789 = vmatprep.subr.mxu0 0.0
        %790 = vmatpush1.msra.mxu0 0.0
        %791 = vmatprep.subr.mxu0 0.0
        %792 = vmatpush1.msra.mxu0 0.0
        %793 = vmatprep.mubr.f32.mxu0 0.0
        %794 = vmatmul.mubr.f32.gmra.mrb[0].mxu0 %v724
        %v795 = vpop.f32.mrb[0].mxu0
        %v796 = vadd.f32 %v721, %v795
        %v797 = vpop.f32.mrb[0].mxu0
        %798 = vmatprep.mubr.f32.mxu0 0.0
        %799 = vmatmul.mubr.f32.gmra.mrb[0].mxu0 %v727
        %v800 = vpop.f32.mrb[0].mxu0
        %v801 = vadd.f32 %v721, %v800
        %v802 = vpop.f32.mrb[0].mxu0
        %803 = vdwg.mxu0
        %v804 = vmax.f32 %v796, 0.0
        %v805 = vmax.f32 %v801, 0.0
        %s806 = scalar_lea.vmem %s4, 64
        %v807 = vld [vmem:[%s806] sm:$0xff]
        %v808 = vld [vmem:[%s806 + $0x8] sm:$0xff]
        %v809 = vld [vmem:[%s806 + $0x10] sm:$0xff]
        %v810 = vld [vmem:[%s806 + $0x18] sm:$0xff]
        %811 = vrot.lane.b32.xlu0 %v463, 32
        %v812 = vpop.permute.xlu0 %811
        %v815 = vsel %vm556, %v804, 0
        %v818 = vsel %vm556, %v805, 0
        %820 = vmatprep.subr.mxu0 0.0
        %821 = vmatpush1.msra.mxu0 %v807
        %822 = vmatprep.subr.mxu0 0.0
        %823 = vmatpush1.msra.mxu0 %v808
        %824 = vmatprep.subr.mxu0 0.0
        %825 = vmatpush1.msra.mxu0 %v809
        %826 = vmatprep.subr.mxu0 0.0
        %827 = vmatpush1.msra.mxu0 %v810
        %828 = vmatprep.subr.mxu0 0.0
        %829 = vmatpush1.msra.mxu0 0.0
        %830 = vmatprep.subr.mxu0 0.0
        %831 = vmatpush1.msra.mxu0 0.0
        %832 = vmatprep.subr.mxu0 0.0
        %833 = vmatpush1.msra.mxu0 0.0
        %834 = vmatprep.subr.mxu0 0.0
        %835 = vmatpush1.msra.mxu0 0.0
        %836 = vmatprep.subr.mxu0 0.0
        %837 = vmatpush1.msra.mxu0 0.0
        %838 = vmatprep.subr.mxu0 0.0
        %839 = vmatpush1.msra.mxu0 0.0
        %840 = vmatprep.subr.mxu0 0.0
        %841 = vmatpush1.msra.mxu0 0.0
        %842 = vmatprep.subr.mxu0 0.0
        %843 = vmatpush1.msra.mxu0 0.0
        %844 = vmatprep.subr.mxu0 0.0
        %845 = vmatpush1.msra.mxu0 0.0
        %846 = vmatprep.subr.mxu0 0.0
        %847 = vmatpush1.msra.mxu0 0.0
        %848 = vmatprep.subr.mxu0 0.0
        %849 = vmatpush1.msra.mxu0 0.0
        %850 = vmatprep.subr.mxu0 0.0
        %851 = vmatpush1.msra.mxu0 0.0
        %852 = vmatprep.subr.mxu0 0.0
        %853 = vmatpush1.msra.mxu0 0.0
        %854 = vmatprep.subr.mxu0 0.0
        %855 = vmatpush1.msra.mxu0 0.0
        %856 = vmatprep.subr.mxu0 0.0
        %857 = vmatpush1.msra.mxu0 0.0
        %858 = vmatprep.subr.mxu0 0.0
        %859 = vmatpush1.msra.mxu0 0.0
        %860 = vmatprep.subr.mxu0 0.0
        %861 = vmatpush1.msra.mxu0 0.0
        %862 = vmatprep.subr.mxu0 0.0
        %863 = vmatpush1.msra.mxu0 0.0
        %864 = vmatprep.subr.mxu0 0.0
        %865 = vmatpush1.msra.mxu0 0.0
        %866 = vmatprep.subr.mxu0 0.0
        %867 = vmatpush1.msra.mxu0 0.0
        %868 = vmatprep.subr.mxu0 0.0
        %869 = vmatpush1.msra.mxu0 0.0
        %870 = vmatprep.subr.mxu0 0.0
        %871 = vmatpush1.msra.mxu0 0.0
        %872 = vmatprep.subr.mxu0 0.0
        %873 = vmatpush1.msra.mxu0 0.0
        %874 = vmatprep.subr.mxu0 0.0
        %875 = vmatpush1.msra.mxu0 0.0
        %876 = vmatprep.subr.mxu0 0.0
        %877 = vmatpush1.msra.mxu0 0.0
        %878 = vmatprep.subr.mxu0 0.0
        %879 = vmatpush1.msra.mxu0 0.0
        %880 = vmatprep.subr.mxu0 0.0
        %881 = vmatpush1.msra.mxu0 0.0
        %882 = vmatprep.subr.mxu0 0.0
        %883 = vmatpush1.msra.mxu0 0.0
        %884 = vmatprep.mubr.f32.mxu0 0.0
        %885 = vmatmul.mubr.f32.gmra.mrb[0].mxu0 %v815
        %v886 = vpop.f32.mrb[0].mxu0
        %v887 = vadd.f32 %v812, %v886
        %v888 = vpop.f32.mrb[0].mxu0
        %889 = vmatprep.mubr.f32.mxu0 0.0
        %890 = vmatmul.mubr.f32.gmra.mrb[0].mxu0 %v818
        %v891 = vpop.f32.mrb[0].mxu0
        %v892 = vadd.f32 %v812, %v891
        %v893 = vpop.f32.mrb[0].mxu0
        %894 = vdwg.mxu0
        %v895 = vmax.f32 %v887, 0.0
        %v896 = vmax.f32 %v892, 0.0
        %v897 = vld [vmem:[#allocation4] sm:$0x3]
        %v899 = vsel %vm377, %v897, 0
        %901 = vmatprep.subr.mxu0 0.0
        %902 = vmatpush1.msra.mxu0 %v895
        %903 = vmatprep.subr.mxu0 0.0
        %904 = vmatpush1.msra.mxu0 %v896
        %905 = vmatprep.subr.mxu0 0.0
        %906 = vmatpush1.msra.mxu0 0.0
        %907 = vmatprep.subr.mxu0 0.0
        %908 = vmatpush1.msra.mxu0 0.0
        %909 = vmatprep.subr.mxu0 0.0
        %910 = vmatpush1.msra.mxu0 0.0
        %911 = vmatprep.subr.mxu0 0.0
        %912 = vmatpush1.msra.mxu0 0.0
        %913 = vmatprep.subr.mxu0 0.0
        %914 = vmatpush1.msra.mxu0 0.0
        %915 = vmatprep.subr.mxu0 0.0
        %916 = vmatpush1.msra.mxu0 0.0
        %917 = vmatprep.subr.mxu0 0.0
        %918 = vmatpush1.msra.mxu0 0.0
        %919 = vmatprep.subr.mxu0 0.0
        %920 = vmatpush1.msra.mxu0 0.0
        %921 = vmatprep.subr.mxu0 0.0
        %922 = vmatpush1.msra.mxu0 0.0
        %923 = vmatprep.subr.mxu0 0.0
        %924 = vmatpush1.msra.mxu0 0.0
        %925 = vmatprep.subr.mxu0 0.0
        %926 = vmatpush1.msra.mxu0 0.0
        %927 = vmatprep.subr.mxu0 0.0
        %928 = vmatpush1.msra.mxu0 0.0
        %929 = vmatprep.subr.mxu0 0.0
        %930 = vmatpush1.msra.mxu0 0.0
        %931 = vmatprep.subr.mxu0 0.0
        %932 = vmatpush1.msra.mxu0 0.0
        %933 = vmatprep.subr.mxu0 0.0
        %934 = vmatpush1.msra.mxu0 0.0
        %935 = vmatprep.subr.mxu0 0.0
        %936 = vmatpush1.msra.mxu0 0.0
        %937 = vmatprep.subr.mxu0 0.0
        %938 = vmatpush1.msra.mxu0 0.0
        %939 = vmatprep.subr.mxu0 0.0
        %940 = vmatpush1.msra.mxu0 0.0
        %941 = vmatprep.subr.mxu0 0.0
        %942 = vmatpush1.msra.mxu0 0.0
        %943 = vmatprep.subr.mxu0 0.0
        %944 = vmatpush1.msra.mxu0 0.0
        %945 = vmatprep.subr.mxu0 0.0
        %946 = vmatpush1.msra.mxu0 0.0
        %947 = vmatprep.subr.mxu0 0.0
        %948 = vmatpush1.msra.mxu0 0.0
        %949 = vmatprep.subr.mxu0 0.0
        %950 = vmatpush1.msra.mxu0 0.0
        %951 = vmatprep.subr.mxu0 0.0
        %952 = vmatpush1.msra.mxu0 0.0
        %953 = vmatprep.subr.mxu0 0.0
        %954 = vmatpush1.msra.mxu0 0.0
        %955 = vmatprep.subr.mxu0 0.0
        %956 = vmatpush1.msra.mxu0 0.0
        %957 = vmatprep.subr.mxu0 0.0
        %958 = vmatpush1.msra.mxu0 0.0
        %959 = vmatprep.subr.mxu0 0.0
        %960 = vmatpush1.msra.mxu0 0.0
        %961 = vmatprep.subr.mxu0 0.0
        %962 = vmatpush1.msra.mxu0 0.0
        %963 = vmatprep.subr.mxu0 0.0
        %964 = vmatpush1.msra.mxu0 0.0
        %965 = vmatprep.mubr.f32.mxu0 0.0
        %966 = vmatmul.mubr.f32.gmra.mrb[0].mxu0 %v899
        %v967 = vpop.f32.mrb[0].mxu0
        %v968 = vadd.f32 0.0, %v967
        %v969 = vpop.f32.mrb[0].mxu0
        %970 = vdwg.mxu0
        %v971 = vld [vmem:[#allocation2] sm:$0x3]
        %v972 = vld [vmem:[#allocation3] sm:$0x3]
        %v973 = vld [vmem:[%s5] sm:$0xff]
        %v974 = vld [vmem:[%s5 + $0x8] sm:$0xff]
        %v975 = vld [vmem:[%s5 + $0x10] sm:$0xff]
        %v976 = vld [vmem:[%s5 + $0x18] sm:$0xff]
        %v977 = vld [vmem:[%s5 + $0x20] sm:$0xff]
        %v978 = vld [vmem:[%s5 + $0x28] sm:$0xff]
        %v979 = vld [vmem:[%s5 + $0x30] sm:$0xff]
        %v980 = vld [vmem:[%s5 + $0x38] sm:$0xff]
        %v982 = vsel %vm556, %v971, 0
        %984 = vmatprep.subr.mxu0 0.0
        %985 = vmatpush1.msra.mxu0 %v977
        %986 = vmatprep.subr.mxu0 0.0
        %987 = vmatpush1.msra.mxu0 %v978
        %988 = vmatprep.subr.mxu0 0.0
        %989 = vmatpush1.msra.mxu0 %v979
        %990 = vmatprep.subr.mxu0 0.0
        %991 = vmatpush1.msra.mxu0 %v980
        %992 = vmatprep.subr.mxu0 0.0
        %993 = vmatpush1.msra.mxu0 0.0
        %994 = vmatprep.subr.mxu0 0.0
        %995 = vmatpush1.msra.mxu0 0.0
        %996 = vmatprep.subr.mxu0 0.0
        %997 = vmatpush1.msra.mxu0 0.0
        %998 = vmatprep.subr.mxu0 0.0
        %999 = vmatpush1.msra.mxu0 0.0
        %1000 = vmatprep.subr.mxu0 0.0
        %1001 = vmatpush1.msra.mxu0 0.0
        %1002 = vmatprep.subr.mxu0 0.0
        %1003 = vmatpush1.msra.mxu0 0.0
        %1004 = vmatprep.subr.mxu0 0.0
        %1005 = vmatpush1.msra.mxu0 0.0
        %1006 = vmatprep.subr.mxu0 0.0
        %1007 = vmatpush1.msra.mxu0 0.0
        %1008 = vmatprep.subr.mxu0 0.0
        %1009 = vmatpush1.msra.mxu0 0.0
        %1010 = vmatprep.subr.mxu0 0.0
        %1011 = vmatpush1.msra.mxu0 0.0
        %1012 = vmatprep.subr.mxu0 0.0
        %1013 = vmatpush1.msra.mxu0 0.0
        %1014 = vmatprep.subr.mxu0 0.0
        %1015 = vmatpush1.msra.mxu0 0.0
        %1016 = vmatprep.subr.mxu0 0.0
        %1017 = vmatpush1.msra.mxu0 0.0
        %1018 = vmatprep.subr.mxu0 0.0
        %1019 = vmatpush1.msra.mxu0 0.0
        %1020 = vmatprep.subr.mxu0 0.0
        %1021 = vmatpush1.msra.mxu0 0.0
        %1022 = vmatprep.subr.mxu0 0.0
        %1023 = vmatpush1.msra.mxu0 0.0
        %1024 = vmatprep.subr.mxu0 0.0
        %1025 = vmatpush1.msra.mxu0 0.0
        %1026 = vmatprep.subr.mxu0 0.0
        %1027 = vmatpush1.msra.mxu0 0.0
        %1028 = vmatprep.subr.mxu0 0.0
        %1029 = vmatpush1.msra.mxu0 0.0
        %1030 = vmatprep.subr.mxu0 0.0
        %1031 = vmatpush1.msra.mxu0 0.0
        %1032 = vmatprep.subr.mxu0 0.0
        %1033 = vmatpush1.msra.mxu0 0.0
        %1034 = vmatprep.subr.mxu0 0.0
        %1035 = vmatpush1.msra.mxu0 0.0
        %1036 = vmatprep.subr.mxu0 0.0
        %1037 = vmatpush1.msra.mxu0 0.0
        %1038 = vmatprep.subr.mxu0 0.0
        %1039 = vmatpush1.msra.mxu0 0.0
        %1040 = vmatprep.subr.mxu0 0.0
        %1041 = vmatpush1.msra.mxu0 0.0
        %1042 = vmatprep.subr.mxu0 0.0
        %1043 = vmatpush1.msra.mxu0 0.0
        %1044 = vmatprep.subr.mxu0 0.0
        %1045 = vmatpush1.msra.mxu0 0.0
        %1046 = vmatprep.subr.mxu0 0.0
        %1047 = vmatpush1.msra.mxu0 0.0
        %1048 = vmatprep.mubr.f32.mxu0 0.0
        %1049 = vmatmul.mubr.f32.gmra.mrb[0].mxu0 %v982
        %v1050 = vpop.f32.mrb[0].mxu0
        %v1051 = vadd.f32 0.0, %v1050
        %v1052 = vpop.f32.mrb[0].mxu0
        %1053 = vdwg.mxu0
        %v1055 = vsel %vm556, %v968, 0
        %1057 = vmatprep.subr.mxu0 0.0
        %1058 = vmatpush1.msra.mxu0 %v973
        %1059 = vmatprep.subr.mxu0 0.0
        %1060 = vmatpush1.msra.mxu0 %v974
        %1061 = vmatprep.subr.mxu0 0.0
        %1062 = vmatpush1.msra.mxu0 %v975
        %1063 = vmatprep.subr.mxu0 0.0
        %1064 = vmatpush1.msra.mxu0 %v976
        %1065 = vmatprep.subr.mxu0 0.0
        %1066 = vmatpush1.msra.mxu0 0.0
        %1067 = vmatprep.subr.mxu0 0.0
        %1068 = vmatpush1.msra.mxu0 0.0
        %1069 = vmatprep.subr.mxu0 0.0
        %1070 = vmatpush1.msra.mxu0 0.0
        %1071 = vmatprep.subr.mxu0 0.0
        %1072 = vmatpush1.msra.mxu0 0.0
        %1073 = vmatprep.subr.mxu0 0.0
        %1074 = vmatpush1.msra.mxu0 0.0
        %1075 = vmatprep.subr.mxu0 0.0
        %1076 = vmatpush1.msra.mxu0 0.0
        %1077 = vmatprep.subr.mxu0 0.0
        %1078 = vmatpush1.msra.mxu0 0.0
        %1079 = vmatprep.subr.mxu0 0.0
        %1080 = vmatpush1.msra.mxu0 0.0
        %1081 = vmatprep.subr.mxu0 0.0
        %1082 = vmatpush1.msra.mxu0 0.0
        %1083 = vmatprep.subr.mxu0 0.0
        %1084 = vmatpush1.msra.mxu0 0.0
        %1085 = vmatprep.subr.mxu0 0.0
        %1086 = vmatpush1.msra.mxu0 0.0
        %1087 = vmatprep.subr.mxu0 0.0
        %1088 = vmatpush1.msra.mxu0 0.0
        %1089 = vmatprep.subr.mxu0 0.0
        %1090 = vmatpush1.msra.mxu0 0.0
        %1091 = vmatprep.subr.mxu0 0.0
        %1092 = vmatpush1.msra.mxu0 0.0
        %1093 = vmatprep.subr.mxu0 0.0
        %1094 = vmatpush1.msra.mxu0 0.0
        %1095 = vmatprep.subr.mxu0 0.0
        %1096 = vmatpush1.msra.mxu0 0.0
        %1097 = vmatprep.subr.mxu0 0.0
        %1098 = vmatpush1.msra.mxu0 0.0
        %1099 = vmatprep.subr.mxu0 0.0
        %1100 = vmatpush1.msra.mxu0 0.0
        %1101 = vmatprep.subr.mxu0 0.0
        %1102 = vmatpush1.msra.mxu0 0.0
        %1103 = vmatprep.subr.mxu0 0.0
        %1104 = vmatpush1.msra.mxu0 0.0
        %1105 = vmatprep.subr.mxu0 0.0
        %1106 = vmatpush1.msra.mxu0 0.0
        %1107 = vmatprep.subr.mxu0 0.0
        %1108 = vmatpush1.msra.mxu0 0.0
        %1109 = vmatprep.subr.mxu0 0.0
        %1110 = vmatpush1.msra.mxu0 0.0
        %1111 = vmatprep.subr.mxu0 0.0
        %1112 = vmatpush1.msra.mxu0 0.0
        %1113 = vmatprep.subr.mxu0 0.0
        %1114 = vmatpush1.msra.mxu0 0.0
        %1115 = vmatprep.subr.mxu0 0.0
        %1116 = vmatpush1.msra.mxu0 0.0
        %1117 = vmatprep.subr.mxu0 0.0
        %1118 = vmatpush1.msra.mxu0 0.0
        %1119 = vmatprep.subr.mxu0 0.0
        %1120 = vmatpush1.msra.mxu0 0.0
        %1121 = vmatprep.mubr.f32.mxu0 0.0
        %1122 = vmatmul.mubr.f32.gmra.mrb[0].mxu0 %v1055
        %v1123 = vpop.f32.mrb[0].mxu0
        %v1124 = vadd.f32 %v1051, %v1123
        %v1125 = vpop.f32.mrb[0].mxu0
        %1126 = vdwg.mxu0
        %v1127 = vlaneseq
        %v1128 = vshrl.u32 %v1127, 7
        %v1129 = vsub.s32 0, %v1128
        %v1130 = vrot.slane %v375, %v1129
        %v1131 = vadd.f32 %v1124, %v1130
        %v1132 = vlaneseq
        %v1133 = vand.u32 %v1132, 127
        %vm1134 = vcmp.ge.s32.totalorder %v1133, 64
        %vm1135 = vcmp.lt.s32.totalorder %v1133, 96
        %vm1136 = vmand %vm1134, %vm1135
        %v1137 = vtanh.pop %v1131
        %v1138 = vxor.u32 %v1131, 2147483648
        %v1139 = vmul.f32 %v1138, 1.442695
        %v1140 = vpow.pop %v1139
        %v1141 = vadd.f32 %v1140, 1.0
        %v1142 = vrcp.pop %v1141
        %v1143 = vmul.f32 1.0, %v1142
        %v1144 = vsel %vm1136, %v1137, %v1143
        %1146 = vrot.lane.b32.xlu0 %v972, 32
        %v1147 = vpop.permute.xlu0 %1146
        %v1149 = vmul.f32 %v1144, %v1147
        %1151 = vrot.lane.b32.xlu0 %v1144, 64
        %v1152 = vpop.permute.xlu0 %1151
        %v1154 = vmul.f32 %v1144, %v1152
        %1156 = vrot.lane.b32.xlu0 %v1154, 32
        %v1157 = vpop.permute.xlu0 %1156
        %v1159 = vadd.f32 %v1149, %v1157
        %v1160 = vtanh.pop %v1159
        %1162 = vrot.lane.b32.xlu0 %v1160, 64
        %v1163 = vpop.permute.xlu0 %1162
        %v1165 = vmul.f32 %v1144, %v1163
        %1167 = vrot.lane.b32.xlu0 %v1165, 32
        %v1168 = vpop.permute.xlu0 %1167
        %vm1170 = vcmask 254976
        %1171 = vst.msk [vmem:[#allocation2] sm:$0x3] %vm1170, %v1168
        %1173 = vrot.lane.b32.xlu0 %v1159, 96
        %v1174 = vpop.permute.xlu0 %1173
        %1176 = vst.msk [vmem:[#allocation3] sm:$0x3] %vm1170, %v1174
        %v1177 = vld [vmem:[%s6] sm:$0xff]
        %v1178 = vld [vmem:[%s6 + $0x8] sm:$0xff]
        %v1179 = vld [vmem:[%s6 + $0x10] sm:$0xff]
        %v1180 = vld [vmem:[%s6 + $0x18] sm:$0xff]
        %v1181 = vlaneseq
        %v1182 = vshrl.u32 %v1181, 7
        %v1183 = vsub.s32 0, %v1182
        %v1184 = vrot.slane %v376, %v1183
        %v1185 = vsel %vm556, %v1168, 0
        %1187 = vmatprep.subr.mxu0 0.0
        %1188 = vmatpush1.msra.mxu0 %v1177
        %1189 = vmatprep.subr.mxu0 0.0
        %1190 = vmatpush1.msra.mxu0 %v1178
        %1191 = vmatprep.subr.mxu0 0.0
        %1192 = vmatpush1.msra.mxu0 %v1179
        %1193 = vmatprep.subr.mxu0 0.0
        %1194 = vmatpush1.msra.mxu0 %v1180
        %1195 = vmatprep.subr.mxu0 0.0
        %1196 = vmatpush1.msra.mxu0 0.0
        %1197 = vmatprep.subr.mxu0 0.0
        %1198 = vmatpush1.msra.mxu0 0.0
        %1199 = vmatprep.subr.mxu0 0.0
        %1200 = vmatpush1.msra.mxu0 0.0
        %1201 = vmatprep.subr.mxu0 0.0
        %1202 = vmatpush1.msra.mxu0 0.0
        %1203 = vmatprep.subr.mxu0 0.0
        %1204 = vmatpush1.msra.mxu0 0.0
        %1205 = vmatprep.subr.mxu0 0.0
        %1206 = vmatpush1.msra.mxu0 0.0
        %1207 = vmatprep.subr.mxu0 0.0
        %1208 = vmatpush1.msra.mxu0 0.0
        %1209 = vmatprep.subr.mxu0 0.0
        %1210 = vmatpush1.msra.mxu0 0.0
        %1211 = vmatprep.subr.mxu0 0.0
        %1212 = vmatpush1.msra.mxu0 0.0
        %1213 = vmatprep.subr.mxu0 0.0
        %1214 = vmatpush1.msra.mxu0 0.0
        %1215 = vmatprep.subr.mxu0 0.0
        %1216 = vmatpush1.msra.mxu0 0.0
        %1217 = vmatprep.subr.mxu0 0.0
        %1218 = vmatpush1.msra.mxu0 0.0
        %1219 = vmatprep.subr.mxu0 0.0
        %1220 = vmatpush1.msra.mxu0 0.0
        %1221 = vmatprep.subr.mxu0 0.0
        %1222 = vmatpush1.msra.mxu0 0.0
        %1223 = vmatprep.subr.mxu0 0.0
        %1224 = vmatpush1.msra.mxu0 0.0
        %1225 = vmatprep.subr.mxu0 0.0
        %1226 = vmatpush1.msra.mxu0 0.0
        %1227 = vmatprep.subr.mxu0 0.0
        %1228 = vmatpush1.msra.mxu0 0.0
        %1229 = vmatprep.subr.mxu0 0.0
        %1230 = vmatpush1.msra.mxu0 0.0
        %1231 = vmatprep.subr.mxu0 0.0
        %1232 = vmatpush1.msra.mxu0 0.0
        %1233 = vmatprep.subr.mxu0 0.0
        %1234 = vmatpush1.msra.mxu0 0.0
        %1235 = vmatprep.subr.mxu0 0.0
        %1236 = vmatpush1.msra.mxu0 0.0
        %1237 = vmatprep.subr.mxu0 0.0
        %1238 = vmatpush1.msra.mxu0 0.0
        %1239 = vmatprep.subr.mxu0 0.0
        %1240 = vmatpush1.msra.mxu0 0.0
        %1241 = vmatprep.subr.mxu0 0.0
        %1242 = vmatpush1.msra.mxu0 0.0
        %1243 = vmatprep.subr.mxu0 0.0
        %1244 = vmatpush1.msra.mxu0 0.0
        %1245 = vmatprep.subr.mxu0 0.0
        %1246 = vmatpush1.msra.mxu0 0.0
        %1247 = vmatprep.subr.mxu0 0.0
        %1248 = vmatpush1.msra.mxu0 0.0
        %1249 = vmatprep.subr.mxu0 0.0
        %1250 = vmatpush1.msra.mxu0 0.0
        %1251 = vmatprep.mubr.f32.mxu0 0.0
        %1252 = vmatmul.mubr.f32.gmra.mrb[0].mxu0 %v1185
        %v1253 = vpop.f32.mrb[0].mxu0
        %v1254 = vadd.f32 %v1184, %v1253
        %v1255 = vpop.f32.mrb[0].mxu0
        %1256 = vdwg.mxu0
        %v1257 = vsel %vm1170, %v1254, -inf
        %1258 = vmax.xlane.f32.xlu0 %v1257
        %v1259 = vpop.xlane.xlu0 %1258
        %v1260 = vsub.f32 %v1254, %v1259
        %v1261 = vmul.f32 %v1260, 1.442695
        %v1262 = vpow.pop %v1261
        %v1263 = vsel %vm1170, %v1262, 0.0
        %1264 = vadd.xlane.f32.xlu0 %v1263
        %v1265 = vpop.xlane.xlu0 %1264
        %v1266 = vrcp.pop %v1265
        %v1267 = vmul.f32 %v1262, %v1266
        %1268 = vrot.lane.b32.xlu0 %v1165, 64
        %v1269 = vpop.permute.xlu0 %1268
        %1271 = vrot.lane.b32.xlu0 %v1159, 32
        %v1272 = vpop.permute.xlu0 %1271
        %v1274 = vsel %vm556, %v1267, %v1269
        %vm1275 = vcmask 523264
        %v1276 = vsel %vm1275, %v1274, %v1272
        %vm1277 = vcmask 785408
        %v1278 = vsel %vm1277, %v1276, 0.0
        %1279 = vst [vmem:[%s356] sm:$0x3] %v1278
        %p1280 = scmp.lt.s32.totalorder %s22, 7
        %s1281 = scalar_select %p1280, %s22, 7
        %s1282 = smul.addr %s1281, 2
        %s1283 = scalar_lea.vmem %s9, %s1282
        // Predicated region
        $region69: #{gnn_policy_forward_seq.1} parent=55 // pred_check
          %p1284 = pneg %p234
        $region70: #{gnn_policy_forward_seq.1} parent=55 // pred_check_branch
          %1286 = sbr.rel (%p1284) target = $region72
        $region71: #{gnn_policy_forward_seq.1} parent=55 // pred_region
          _
        $region72: #{gnn_policy_forward_seq.1} parent=55 // pred_fallthru
          _
      $region56: #{gnn_policy_forward_seq.1} parent=5 // pred_fallthru
        _
      %p1287 = scmp.le.s32.totalorder 2, %s17
      // Predicated region
      $region73: #{gnn_policy_forward_seq.1} parent=5 // pred_check
        %p1288 = pneg %p1287
      $region74: #{gnn_policy_forward_seq.1} parent=5 // pred_check_branch
        %1290 = sbr.rel (%p1288) target = $region76
      $region75: #{gnn_policy_forward_seq.1} parent=5 // pred_region
        %s1291 = ssub.s32 %s17, 2
        // Predicated region
        $region77: #{gnn_policy_forward_seq.1} parent=75 // pred_check
          %p1292 = pneg %p240
        $region78: #{gnn_policy_forward_seq.1} parent=75 // pred_check_branch
          %1294 = sbr.rel (%p1292) target = $region80
        $region79: #{gnn_policy_forward_seq.1} parent=75 // pred_region
          %p1295 = scmp.lt.s32.totalorder %s23, 7
          %s1296 = scalar_select %p1295, %s23, 7
          %s1297 = smul.addr %s1296, 2
          %s1298 = scalar_lea.vmem %s9, %s1297
        $region80: #{gnn_policy_forward_seq.1} parent=75 // pred_fallthru
          _
      $region76: #{gnn_policy_forward_seq.1} parent=5 // pred_fallthru
        _
    $region6: #{gnn_policy_forward_seq.1} parent=1 // loop_footer
      %s21 = sadd.s32 1, %s17
    $region7: #{gnn_policy_forward_seq.1} parent=1 // loop_footer_branch
      %16 = sbr.rel target = $region3
    $region8: #{gnn_policy_forward_seq.1} parent=1 // loop_exit
      _
    %1299 = vsyncpa [#allocation5], 1
    %s1300 = scalar_lea.sflag [#allocation5], 1
    %1301 = vsyncpa %s1300, 1
    %1302 = vsyncpa [#allocation7], 1

</llo_original>
